<compile_context>
chip_gen: v6e
topology: v6e:2x2x1
jax: 0.10.0
libtpu: 0.0.40
codegen_flags: <defaults>
</compile_context>

<pallas_src>
import functools
import math

import jax
import jax.numpy as jnp
from jax.experimental import pallas as pl
from jax.experimental.pallas import tpu as pltpu


def _layernorm(x, gamma, beta, eps=1e-5):
    # x: (TQ, D) f32; gamma/beta: (1, D) f32
    mean = jnp.mean(x, axis=-1, keepdims=True)
    var = jnp.mean((x - mean) * (x - mean), axis=-1, keepdims=True)
    inv = jax.lax.rsqrt(var + eps)
    return (x - mean) * inv * gamma + beta


def _encoder_layer_kernel(
    x_ref,
    wq_ref, bq_ref, wk_ref, bk_ref, wv_ref, bv_ref,
    wo_ref, bo_ref,
    g1_ref, be1_ref,
    w1_ref, b1_ref, w2_ref, b2_ref,
    g2_ref, be2_ref,
    o_ref,
    k_scr, v_scr, q_scr, ctx_scr,
    *, num_heads, head_dim, q_tile, ff_chunk,
):
    H, hd, TQ = num_heads, head_dim, q_tile
    D = H * hd
    s_idx = pl.program_id(1)

    # ---- K / V for the whole sequence of this batch element: computed once (at
    #      the first query tile) and kept in VMEM scratch across the inner axis.
    @pl.when(s_idx == 0)
    def _():
        x_all = x_ref[...].astype(jnp.bfloat16)                          # (S, D)
        k = jnp.dot(x_all, wk_ref[...],
                    preferred_element_type=jnp.float32) + bk_ref[...]
        v = jnp.dot(x_all, wv_ref[...],
                    preferred_element_type=jnp.float32) + bv_ref[...]
        k_scr[...] = k.astype(jnp.bfloat16)
        v_scr[...] = v.astype(jnp.bfloat16)

    # ---- query-row tile of this grid step
    row0 = pl.multiple_of(s_idx * TQ, TQ)
    x_t = x_ref[pl.ds(row0, TQ), :]                                      # (TQ, D) f32
    x_bf = x_t.astype(jnp.bfloat16)

    q = jnp.dot(x_bf, wq_ref[...],
                preferred_element_type=jnp.float32) + bq_ref[...]        # (TQ, D) f32
    q_scr[...] = q.astype(jnp.bfloat16)

    # ---- per-head scaled dot-product attention.
    #      Heads are read through static lane-slices of the VMEM scratch refs and
    #      each head's context is stored back into ctx_scr (no concat, no value
    #      lane-shuffles); only one head's (TQ, S) scores are live at a time.
    scale = 1.0 / math.sqrt(hd)
    nt_dims = (((1,), (1,)), ((), ()))   # contract last dims: q @ k^T
    for h in range(H):
        lo = h * hd
        qh = q_scr[:, lo:lo + hd]                                        # (TQ, hd) bf16
        kh = k_scr[:, lo:lo + hd]                                        # (S,  hd) bf16
        vh = v_scr[:, lo:lo + hd]                                        # (S,  hd) bf16
        s = jax.lax.dot_general(qh, kh, nt_dims,
                                preferred_element_type=jnp.float32) * scale  # (TQ, S)
        s = s - jnp.max(s, axis=-1, keepdims=True)
        p = jnp.exp(s)
        denom = jnp.sum(p, axis=-1, keepdims=True)
        p = p * pl.reciprocal(denom, approx=True)
        ctx = jnp.dot(p.astype(jnp.bfloat16), vh,
                      preferred_element_type=jnp.float32)                # (TQ, hd)
        ctx_scr[:, lo:lo + hd] = ctx.astype(jnp.bfloat16)

    attn = jnp.dot(ctx_scr[...], wo_ref[...],
                   preferred_element_type=jnp.float32) + bo_ref[...]     # (TQ, D)

    # dropout -> identity (eval / deterministic mode)
    y = _layernorm(attn + x_t, g1_ref[...], be1_ref[...])                # f32

    # ---- position-wise FFN, chunked over the 4*D hidden dimension
    y_bf = y.astype(jnp.bfloat16)
    ff_dim = w1_ref.shape[1]
    ff = jnp.zeros((TQ, D), jnp.float32)
    for c in range(ff_dim // ff_chunk):
        lo = c * ff_chunk
        hid = jnp.dot(y_bf, w1_ref[:, lo:lo + ff_chunk],
                      preferred_element_type=jnp.float32) + b1_ref[:, lo:lo + ff_chunk]
        hid = jnp.maximum(hid, 0.0).astype(jnp.bfloat16)
        ff = ff + jnp.dot(hid, w2_ref[lo:lo + ff_chunk, :],
                          preferred_element_type=jnp.float32)
    ff = ff + b2_ref[...]

    out = _layernorm(ff + y, g2_ref[...], be2_ref[...])
    o_ref[...] = out.astype(o_ref.dtype)


def fuse_params(params):
    """Fuse the head_dim-contraction projection chains and cast matmul weights to bf16."""
    bf16 = jnp.bfloat16
    return {
        "wq": (params["wpq"] @ params["wq"]).astype(bf16), "bq": params["bq"],
        "wk": (params["wpk"] @ params["wk"]).astype(bf16), "bk": params["bk"],
        "wv": (params["wpv"] @ params["wv"]).astype(bf16), "bv": params["bv"],
        "wo": params["wo"].astype(bf16), "bo": params["bo"],
        "g1": params["g1"], "be1": params["be1"],
        "w1": params["w1"].astype(bf16), "b1": params["b1"],
        "w2": params["w2"].astype(bf16), "b2": params["b2"],
        "g2": params["g2"], "be2": params["be2"],
    }


def encoder_layer(x, fused, num_heads):
    """x: (B, S, D) float32. fused: dict from fuse_params(). Returns (B, S, D)."""
    B, S, D = x.shape
    assert D % num_heads == 0
    head_dim = D // num_heads
    ff_dim = fused["w1"].shape[1]

    order = ["wq", "bq", "wk", "bk", "wv", "bv", "wo", "bo",
             "g1", "be1", "w1", "b1", "w2", "b2", "g2", "be2"]
    weights = [fused[k] for k in order]

    # sequence (query-row) tile and FFN hidden chunk
    TQ = 128 if (S % 128 == 0) else S
    n_s_tiles = S // TQ
    ff_chunk = 512 if (ff_dim > 512 and ff_dim % 512 == 0) else ff_dim

    def w_spec(w):
        return pl.BlockSpec(w.shape, lambda b, s: (0, 0))   # all weights are 2D

    kernel = functools.partial(
        _encoder_layer_kernel,
        num_heads=num_heads, head_dim=head_dim, q_tile=TQ, ff_chunk=ff_chunk,
    )

    return pl.pallas_call(
        kernel,
        out_shape=jax.ShapeDtypeStruct((B, S, D), x.dtype),
        grid_spec=pltpu.PrefetchScalarGridSpec(
            num_scalar_prefetch=0,
            grid=(B, n_s_tiles),
            in_specs=[pl.BlockSpec((None, S, D), lambda b, s: (b, 0, 0))]
                     + [w_spec(w) for w in weights],
            out_specs=pl.BlockSpec((None, TQ, D), lambda b, s: (b, s, 0)),
            scratch_shapes=[
                pltpu.VMEM((S, D), jnp.bfloat16),    # K, whole sequence (per batch elem)
                pltpu.VMEM((S, D), jnp.bfloat16),    # V, whole sequence
                pltpu.VMEM((TQ, D), jnp.bfloat16),   # Q tile (head-sliced via ref loads)
                pltpu.VMEM((TQ, D), jnp.bfloat16),   # per-head context merge buffer
            ],
        ),
        compiler_params=pltpu.CompilerParams(
            dimension_semantics=("parallel", "arbitrary"),
            vmem_limit_bytes=48 * 1024 * 1024,
        ),
    )(x, *weights)


def init_params(key, model_dim, num_heads):
    head_dim = model_dim // num_heads
    ff_dim = 4 * model_dim
    ks = jax.random.split(key, 16)
    n = iter(range(16))

    def w(shape, k):
        fan_in = shape[0]
        return jax.random.normal(k, shape, jnp.float32) / math.sqrt(fan_in)

    params = {
        # _linear_projection weights (model_dim -> head_dim, no bias)
        "wpq": w((model_dim, head_dim), ks[next(n)]),
        "wpk": w((model_dim, head_dim), ks[next(n)]),
        "wpv": w((model_dim, head_dim), ks[next(n)]),
        # MHA q/k/v projections (head_dim -> model_dim) + biases
        "wq": w((head_dim, model_dim), ks[next(n)]),
        "bq": jax.random.normal(ks[next(n)], (1, model_dim), jnp.float32) * 0.01,
        "wk": w((head_dim, model_dim), ks[next(n)]),
        "bk": jax.random.normal(ks[next(n)], (1, model_dim), jnp.float32) * 0.01,
        "wv": w((head_dim, model_dim), ks[next(n)]),
        "bv": jax.random.normal(ks[next(n)], (1, model_dim), jnp.float32) * 0.01,
        # MHA output projection
        "wo": w((model_dim, model_dim), ks[next(n)]),
        "bo": jax.random.normal(ks[next(n)], (1, model_dim), jnp.float32) * 0.01,
        # LayerNorm 1
        "g1": jnp.ones((1, model_dim), jnp.float32),
        "be1": jnp.zeros((1, model_dim), jnp.float32),
        # FFN
        "w1": w((model_dim, ff_dim), ks[next(n)]),
        "b1": jax.random.normal(ks[next(n)], (1, ff_dim), jnp.float32) * 0.01,
        "w2": w((ff_dim, model_dim), ks[next(n)]),
        "b2": jax.random.normal(ks[next(n)], (1, model_dim), jnp.float32) * 0.01,
        # LayerNorm 2
        "g2": jnp.ones((1, model_dim), jnp.float32),
        "be2": jnp.zeros((1, model_dim), jnp.float32),
    }
    return params


def _reference(x, fused, num_heads):
    """Pure-JAX f32 reference of the same forward pass (same bf16-rounded weights)."""
    p = {k: jnp.asarray(v, jnp.float32) for k, v in fused.items()}
    B, S, D = x.shape
    hd = D // num_heads

    def ln(v, g, b):
        m = jnp.mean(v, -1, keepdims=True)
        var = jnp.mean((v - m) ** 2, -1, keepdims=True)
        return (v - m) * jax.lax.rsqrt(var + 1e-5) * g + b

    q = x @ p["wq"] + p["bq"]
    k = x @ p["wk"] + p["bk"]
    v = x @ p["wv"] + p["bv"]
    qh = q.reshape(B, S, num_heads, hd).transpose(0, 2, 1, 3)
    kh = k.reshape(B, S, num_heads, hd).transpose(0, 2, 1, 3)
    vh = v.reshape(B, S, num_heads, hd).transpose(0, 2, 1, 3)
    s = jnp.einsum("bhqd,bhkd->bhqk", qh, kh) / math.sqrt(hd)
    pr = jax.nn.softmax(s, axis=-1)
    o = jnp.einsum("bhqk,bhkd->bhqd", pr, vh).transpose(0, 2, 1, 3).reshape(B, S, D)
    attn = o @ p["wo"] + p["bo"]
    y = ln(attn + x, p["g1"], p["be1"])
    ff = jnp.maximum(y @ p["w1"] + p["b1"], 0.0) @ p["w2"] + p["b2"]
    return ln(ff + y, p["g2"], p["be2"])


if __name__ == "__main__":
    # Small shapes consistent with the module: batch=2, seq=8, model_dim=32, heads=4.
    B, S, D, H = 2, 8, 32, 4
    key = jax.random.PRNGKey(0)
    kx, kp = jax.random.split(key)
    x = jax.random.normal(kx, (B, S, D), jnp.float32)
    params = init_params(kp, D, H)
    fused = fuse_params(params)

    out = encoder_layer(x, fused, num_heads=H)
    out = jax.block_until_ready(out)

    ref = _reference(x, fused, H)
    assert out.shape == (B, S, D)
    # Tolerance loosened because the kernel feeds bf16 operands to the MXU
    # (activations rounded to bf16); statistics/residuals are kept in f32.
    assert jnp.allclose(out, ref, atol=5e-2, rtol=5e-2), "mismatch vs JAX reference"

    # TODO(synk): dropout (p=0.1) is treated as identity (eval mode); the original
    # MultiHeadAttention class body was not provided, a standard MHA is assumed.
    print("KERNEL_OK")
</pallas_src>

<mosaic_0001>
module attributes {stable_mosaic.version = 11 : i64} {
  func.func @_encoder_layer_kernel(%arg0: i32, %arg1: i32, %arg2: memref<1x8x32xf32, #tpu.memory_space<vmem>>, %arg3: memref<32x32xbf16, #tpu.memory_space<vmem>>, %arg4: memref<1x32xf32, #tpu.memory_space<vmem>>, %arg5: memref<32x32xbf16, #tpu.memory_space<vmem>>, %arg6: memref<1x32xf32, #tpu.memory_space<vmem>>, %arg7: memref<32x32xbf16, #tpu.memory_space<vmem>>, %arg8: memref<1x32xf32, #tpu.memory_space<vmem>>, %arg9: memref<32x32xbf16, #tpu.memory_space<vmem>>, %arg10: memref<1x32xf32, #tpu.memory_space<vmem>>, %arg11: memref<1x32xf32, #tpu.memory_space<vmem>>, %arg12: memref<1x32xf32, #tpu.memory_space<vmem>>, %arg13: memref<32x128xbf16, #tpu.memory_space<vmem>>, %arg14: memref<1x128xf32, #tpu.memory_space<vmem>>, %arg15: memref<128x32xbf16, #tpu.memory_space<vmem>>, %arg16: memref<1x32xf32, #tpu.memory_space<vmem>>, %arg17: memref<1x32xf32, #tpu.memory_space<vmem>>, %arg18: memref<1x32xf32, #tpu.memory_space<vmem>>, %arg19: memref<1x8x32xf32, #tpu.memory_space<vmem>>, %arg20: memref<8x32xbf16, #tpu.memory_space<vmem>>, %arg21: memref<8x32xbf16, #tpu.memory_space<vmem>>, %arg22: memref<8x32xbf16, #tpu.memory_space<vmem>>, %arg23: memref<8x32xbf16, #tpu.memory_space<vmem>>) attributes {dimension_semantics = [#tpu.dimension_semantics<parallel>, #tpu.dimension_semantics<arbitrary>], iteration_bounds = array<i64: 2, 1>, scalar_prefetch = 0 : i64, scratch_operands = 4 : i64, tpu.core_type = #tpu.core_type<tc>, window_params = [{transform_indices = @transform_0, window_bounds = array<i64: 1, 8, 32>}, {pipeline_mode = #tpu.pipeline_mode<synchronous>, transform_indices = @transform_1, window_bounds = array<i64: 32, 32>}, {pipeline_mode = #tpu.pipeline_mode<synchronous>, transform_indices = @transform_2, window_bounds = array<i64: 1, 32>}, {pipeline_mode = #tpu.pipeline_mode<synchronous>, transform_indices = @transform_3, window_bounds = array<i64: 32, 32>}, {pipeline_mode = #tpu.pipeline_mode<synchronous>, transform_indices = @transform_4, window_bounds = array<i64: 1, 32>}, {pipeline_mode = #tpu.pipeline_mode<synchronous>, transform_indices = @transform_5, window_bounds = array<i64: 32, 32>}, {pipeline_mode = #tpu.pipeline_mode<synchronous>, transform_indices = @transform_6, window_bounds = array<i64: 1, 32>}, {pipeline_mode = #tpu.pipeline_mode<synchronous>, transform_indices = @transform_7, window_bounds = array<i64: 32, 32>}, {pipeline_mode = #tpu.pipeline_mode<synchronous>, transform_indices = @transform_8, window_bounds = array<i64: 1, 32>}, {pipeline_mode = #tpu.pipeline_mode<synchronous>, transform_indices = @transform_9, window_bounds = array<i64: 1, 32>}, {pipeline_mode = #tpu.pipeline_mode<synchronous>, transform_indices = @transform_10, window_bounds = array<i64: 1, 32>}, {pipeline_mode = #tpu.pipeline_mode<synchronous>, transform_indices = @transform_11, window_bounds = array<i64: 32, 128>}, {pipeline_mode = #tpu.pipeline_mode<synchronous>, transform_indices = @transform_12, window_bounds = array<i64: 1, 128>}, {pipeline_mode = #tpu.pipeline_mode<synchronous>, transform_indices = @transform_13, window_bounds = array<i64: 128, 32>}, {pipeline_mode = #tpu.pipeline_mode<synchronous>, transform_indices = @transform_14, window_bounds = array<i64: 1, 32>}, {pipeline_mode = #tpu.pipeline_mode<synchronous>, transform_indices = @transform_15, window_bounds = array<i64: 1, 32>}, {pipeline_mode = #tpu.pipeline_mode<synchronous>, transform_indices = @transform_16, window_bounds = array<i64: 1, 32>}, {transform_indices = @transform_17, window_bounds = array<i64: 1, 8, 32>}]} {
    %c0_i32 = arith.constant 0 : i32
    %0 = arith.cmpi eq, %arg1, %c0_i32 : i32
    %1 = arith.extui %0 : i1 to i32
    %c0_i32_0 = arith.constant 0 : i32
    %2 = arith.cmpi ne, %1, %c0_i32_0 : i32
    scf.if %2 {
      %c0_97 = arith.constant 0 : index
      %c0_98 = arith.constant 0 : index
      %c0_99 = arith.constant 0 : index
      %175 = vector.load %arg2[%c0_97, %c0_98, %c0_99] : memref<1x8x32xf32, #tpu.memory_space<vmem>>, vector<1x8x32xf32>
      %176 = vector.shape_cast %175 : vector<1x8x32xf32> to vector<8x32xf32>
      %177 = arith.truncf %176 : vector<8x32xf32> to vector<8x32xbf16>
      %c0_100 = arith.constant 0 : index
      %c0_101 = arith.constant 0 : index
      %178 = vector.load %arg5[%c0_100, %c0_101] : memref<32x32xbf16, #tpu.memory_space<vmem>>, vector<32x32xbf16>
      %cst_102 = arith.constant dense<0.000000e+00> : vector<8x32xf32>
      %179 = tpu.matmul %177, %178, %cst_102 {dimension_numbers = #tpu.dot_dimension_numbers<[1], [0], [0], [1], [0, 0, 1, 1], [], []>} : vector<8x32xbf16>, vector<32x32xbf16>, vector<8x32xf32> -> vector<8x32xf32>
      %c0_103 = arith.constant 0 : index
      %c0_104 = arith.constant 0 : index
      %180 = vector.load %arg6[%c0_103, %c0_104] : memref<1x32xf32, #tpu.memory_space<vmem>>, vector<1x32xf32>
      %181 = vector.broadcast %180 : vector<1x32xf32> to vector<8x32xf32>
      %182 = arith.addf %179, %181 : vector<8x32xf32>
      %c0_105 = arith.constant 0 : index
      %c0_106 = arith.constant 0 : index
      %183 = vector.load %arg7[%c0_105, %c0_106] : memref<32x32xbf16, #tpu.memory_space<vmem>>, vector<32x32xbf16>
      %cst_107 = arith.constant dense<0.000000e+00> : vector<8x32xf32>
      %184 = tpu.matmul %177, %183, %cst_107 {dimension_numbers = #tpu.dot_dimension_numbers<[1], [0], [0], [1], [0, 0, 1, 1], [], []>} : vector<8x32xbf16>, vector<32x32xbf16>, vector<8x32xf32> -> vector<8x32xf32>
      %c0_108 = arith.constant 0 : index
      %c0_109 = arith.constant 0 : index
      %185 = vector.load %arg8[%c0_108, %c0_109] : memref<1x32xf32, #tpu.memory_space<vmem>>, vector<1x32xf32>
      %186 = vector.broadcast %185 : vector<1x32xf32> to vector<8x32xf32>
      %187 = arith.addf %184, %186 : vector<8x32xf32>
      %188 = arith.truncf %182 : vector<8x32xf32> to vector<8x32xbf16>
      %c0_110 = arith.constant 0 : index
      %c0_111 = arith.constant 0 : index
      %189 = vector.load %arg20[%c0_110, %c0_111] : memref<8x32xbf16, #tpu.memory_space<vmem>>, vector<8x32xbf16>
      tpu.vector_store %arg20[%c0_110, %c0_111], %188 {strides = array<i32>} : memref<8x32xbf16, #tpu.memory_space<vmem>>, vector<8x32xbf16>,
      %190 = arith.truncf %187 : vector<8x32xf32> to vector<8x32xbf16>
      %c0_112 = arith.constant 0 : index
      %c0_113 = arith.constant 0 : index
      %191 = vector.load %arg21[%c0_112, %c0_113] : memref<8x32xbf16, #tpu.memory_space<vmem>>, vector<8x32xbf16>
      tpu.vector_store %arg21[%c0_112, %c0_113], %190 {strides = array<i32>} : memref<8x32xbf16, #tpu.memory_space<vmem>>, vector<8x32xbf16>,
    } else {
    }
    %c8_i32 = arith.constant 8 : i32
    %3 = arith.muli %arg1, %c8_i32 : i32
    %4 = tpu.assume_multiple %3, 8 : i32
    %c0 = arith.constant 0 : index
    %5 = arith.index_cast %4 : i32 to index
    %c0_1 = arith.constant 0 : index
    %6 = vector.load %arg2[%c0, %5, %c0_1] : memref<1x8x32xf32, #tpu.memory_space<vmem>>, vector<1x8x32xf32>
    %7 = vector.shape_cast %6 : vector<1x8x32xf32> to vector<8x32xf32>
    %8 = arith.truncf %7 : vector<8x32xf32> to vector<8x32xbf16>
    %c0_2 = arith.constant 0 : index
    %c0_3 = arith.constant 0 : index
    %9 = vector.load %arg3[%c0_2, %c0_3] : memref<32x32xbf16, #tpu.memory_space<vmem>>, vector<32x32xbf16>
    %cst = arith.constant dense<0.000000e+00> : vector<8x32xf32>
    %10 = tpu.matmul %8, %9, %cst {dimension_numbers = #tpu.dot_dimension_numbers<[1], [0], [0], [1], [0, 0, 1, 1], [], []>} : vector<8x32xbf16>, vector<32x32xbf16>, vector<8x32xf32> -> vector<8x32xf32>
    %c0_4 = arith.constant 0 : index
    %c0_5 = arith.constant 0 : index
    %11 = vector.load %arg4[%c0_4, %c0_5] : memref<1x32xf32, #tpu.memory_space<vmem>>, vector<1x32xf32>
    %12 = vector.broadcast %11 : vector<1x32xf32> to vector<8x32xf32>
    %13 = arith.addf %10, %12 : vector<8x32xf32>
    %14 = arith.truncf %13 : vector<8x32xf32> to vector<8x32xbf16>
    %c0_6 = arith.constant 0 : index
    %c0_7 = arith.constant 0 : index
    %15 = vector.load %arg22[%c0_6, %c0_7] : memref<8x32xbf16, #tpu.memory_space<vmem>>, vector<8x32xbf16>
    tpu.vector_store %arg22[%c0_6, %c0_7], %14 {strides = array<i32>} : memref<8x32xbf16, #tpu.memory_space<vmem>>, vector<8x32xbf16>,
    %c0_8 = arith.constant 0 : index
    %c0_9 = arith.constant 0 : index
    %16 = vector.load %arg22[%c0_8, %c0_9] : memref<8x32xbf16, #tpu.memory_space<vmem>>, vector<8x8xbf16>
    %c0_10 = arith.constant 0 : index
    %c0_11 = arith.constant 0 : index
    %17 = vector.load %arg20[%c0_10, %c0_11] : memref<8x32xbf16, #tpu.memory_space<vmem>>, vector<8x8xbf16>
    %c0_12 = arith.constant 0 : index
    %c0_13 = arith.constant 0 : index
    %18 = vector.load %arg21[%c0_12, %c0_13] : memref<8x32xbf16, #tpu.memory_space<vmem>>, vector<8x8xbf16>
    %cst_14 = arith.constant dense<0.000000e+00> : vector<8x8xf32>
    %19 = tpu.matmul %16, %17, %cst_14 {dimension_numbers = #tpu.dot_dimension_numbers<[1], [1], [0], [0], [0, 0, 1, 0], [], []>} : vector<8x8xbf16>, vector<8x8xbf16>, vector<8x8xf32> -> vector<8x8xf32>
    %cst_15 = arith.constant 0.353553385 : f32
    %20 = vector.broadcast %cst_15 : f32 to vector<8x8xf32>
    %21 = arith.mulf %19, %20 : vector<8x8xf32>
    %cst_16 = arith.constant dense<0xFF800000> : vector<8xf32>
    %22 = vector.multi_reduction <maximumf>, %21, %cst_16 [1] : vector<8x8xf32> to vector<8xf32>
    %23 = vector.shape_cast %22 : vector<8xf32> to vector<8x1xf32>
    %24 = vector.broadcast %23 : vector<8x1xf32> to vector<8x8xf32>
    %25 = arith.subf %21, %24 : vector<8x8xf32>
    %26 = math.exp %25 : vector<8x8xf32>
    %cst_17 = arith.constant dense<0.000000e+00> : vector<8xf32>
    %27 = vector.multi_reduction <add>, %26, %cst_17 [1] : vector<8x8xf32> to vector<8xf32>
    %28 = vector.shape_cast %27 : vector<8xf32> to vector<8x1xf32>
    %29 = tpu.reciprocal %28 {approx = true} : vector<8x1xf32> -> vector<8x1xf32>
    %30 = vector.broadcast %29 : vector<8x1xf32> to vector<8x8xf32>
    %31 = arith.mulf %26, %30 : vector<8x8xf32>
    %32 = arith.truncf %31 : vector<8x8xf32> to vector<8x8xbf16>
    %cst_18 = arith.constant dense<0.000000e+00> : vector<8x8xf32>
    %33 = tpu.matmul %32, %18, %cst_18 {dimension_numbers = #tpu.dot_dimension_numbers<[1], [0], [0], [1], [0, 0, 1, 1], [], []>} : vector<8x8xbf16>, vector<8x8xbf16>, vector<8x8xf32> -> vector<8x8xf32>
    %34 = arith.truncf %33 : vector<8x8xf32> to vector<8x8xbf16>
    %c0_19 = arith.constant 0 : index
    %c0_20 = arith.constant 0 : index
    %35 = vector.load %arg23[%c0_19, %c0_20] : memref<8x32xbf16, #tpu.memory_space<vmem>>, vector<8x8xbf16>
    tpu.vector_store %arg23[%c0_19, %c0_20], %34 {strides = array<i32>} : memref<8x32xbf16, #tpu.memory_space<vmem>>, vector<8x8xbf16>,
    %c0_21 = arith.constant 0 : index
    %c8 = arith.constant 8 : index
    %36 = vector.load %arg22[%c0_21, %c8] : memref<8x32xbf16, #tpu.memory_space<vmem>>, vector<8x8xbf16>
    %c0_22 = arith.constant 0 : index
    %c8_23 = arith.constant 8 : index
    %37 = vector.load %arg20[%c0_22, %c8_23] : memref<8x32xbf16, #tpu.memory_space<vmem>>, vector<8x8xbf16>
    %c0_24 = arith.constant 0 : index
    %c8_25 = arith.constant 8 : index
    %38 = vector.load %arg21[%c0_24, %c8_25] : memref<8x32xbf16, #tpu.memory_space<vmem>>, vector<8x8xbf16>
    %cst_26 = arith.constant dense<0.000000e+00> : vector<8x8xf32>
    %39 = tpu.matmul %36, %37, %cst_26 {dimension_numbers = #tpu.dot_dimension_numbers<[1], [1], [0], [0], [0, 0, 1, 0], [], []>} : vector<8x8xbf16>, vector<8x8xbf16>, vector<8x8xf32> -> vector<8x8xf32>
    %cst_27 = arith.constant 0.353553385 : f32
    %40 = vector.broadcast %cst_27 : f32 to vector<8x8xf32>
    %41 = arith.mulf %39, %40 : vector<8x8xf32>
    %cst_28 = arith.constant dense<0xFF800000> : vector<8xf32>
    %42 = vector.multi_reduction <maximumf>, %41, %cst_28 [1] : vector<8x8xf32> to vector<8xf32>
    %43 = vector.shape_cast %42 : vector<8xf32> to vector<8x1xf32>
    %44 = vector.broadcast %43 : vector<8x1xf32> to vector<8x8xf32>
    %45 = arith.subf %41, %44 : vector<8x8xf32>
    %46 = math.exp %45 : vector<8x8xf32>
    %cst_29 = arith.constant dense<0.000000e+00> : vector<8xf32>
    %47 = vector.multi_reduction <add>, %46, %cst_29 [1] : vector<8x8xf32> to vector<8xf32>
    %48 = vector.shape_cast %47 : vector<8xf32> to vector<8x1xf32>
    %49 = tpu.reciprocal %48 {approx = true} : vector<8x1xf32> -> vector<8x1xf32>
    %50 = vector.broadcast %49 : vector<8x1xf32> to vector<8x8xf32>
    %51 = arith.mulf %46, %50 : vector<8x8xf32>
    %52 = arith.truncf %51 : vector<8x8xf32> to vector<8x8xbf16>
    %cst_30 = arith.constant dense<0.000000e+00> : vector<8x8xf32>
    %53 = tpu.matmul %52, %38, %cst_30 {dimension_numbers = #tpu.dot_dimension_numbers<[1], [0], [0], [1], [0, 0, 1, 1], [], []>} : vector<8x8xbf16>, vector<8x8xbf16>, vector<8x8xf32> -> vector<8x8xf32>
    %54 = arith.truncf %53 : vector<8x8xf32> to vector<8x8xbf16>
    %c0_31 = arith.constant 0 : index
    %c8_32 = arith.constant 8 : index
    %55 = vector.load %arg23[%c0_31, %c8_32] : memref<8x32xbf16, #tpu.memory_space<vmem>>, vector<8x8xbf16>
    tpu.vector_store %arg23[%c0_31, %c8_32], %54 {strides = array<i32>} : memref<8x32xbf16, #tpu.memory_space<vmem>>, vector<8x8xbf16>,
    %c0_33 = arith.constant 0 : index
    %c16 = arith.constant 16 : index
    %56 = vector.load %arg22[%c0_33, %c16] : memref<8x32xbf16, #tpu.memory_space<vmem>>, vector<8x8xbf16>
    %c0_34 = arith.constant 0 : index
    %c16_35 = arith.constant 16 : index
    %57 = vector.load %arg20[%c0_34, %c16_35] : memref<8x32xbf16, #tpu.memory_space<vmem>>, vector<8x8xbf16>
    %c0_36 = arith.constant 0 : index
    %c16_37 = arith.constant 16 : index
    %58 = vector.load %arg21[%c0_36, %c16_37] : memref<8x32xbf16, #tpu.memory_space<vmem>>, vector<8x8xbf16>
    %cst_38 = arith.constant dense<0.000000e+00> : vector<8x8xf32>
    %59 = tpu.matmul %56, %57, %cst_38 {dimension_numbers = #tpu.dot_dimension_numbers<[1], [1], [0], [0], [0, 0, 1, 0], [], []>} : vector<8x8xbf16>, vector<8x8xbf16>, vector<8x8xf32> -> vector<8x8xf32>
    %cst_39 = arith.constant 0.353553385 : f32
    %60 = vector.broadcast %cst_39 : f32 to vector<8x8xf32>
    %61 = arith.mulf %59, %60 : vector<8x8xf32>
    %cst_40 = arith.constant dense<0xFF800000> : vector<8xf32>
    %62 = vector.multi_reduction <maximumf>, %61, %cst_40 [1] : vector<8x8xf32> to vector<8xf32>
    %63 = vector.shape_cast %62 : vector<8xf32> to vector<8x1xf32>
    %64 = vector.broadcast %63 : vector<8x1xf32> to vector<8x8xf32>
    %65 = arith.subf %61, %64 : vector<8x8xf32>
    %66 = math.exp %65 : vector<8x8xf32>
    %cst_41 = arith.constant dense<0.000000e+00> : vector<8xf32>
    %67 = vector.multi_reduction <add>, %66, %cst_41 [1] : vector<8x8xf32> to vector<8xf32>
    %68 = vector.shape_cast %67 : vector<8xf32> to vector<8x1xf32>
    %69 = tpu.reciprocal %68 {approx = true} : vector<8x1xf32> -> vector<8x1xf32>
    %70 = vector.broadcast %69 : vector<8x1xf32> to vector<8x8xf32>
    %71 = arith.mulf %66, %70 : vector<8x8xf32>
    %72 = arith.truncf %71 : vector<8x8xf32> to vector<8x8xbf16>
    %cst_42 = arith.constant dense<0.000000e+00> : vector<8x8xf32>
    %73 = tpu.matmul %72, %58, %cst_42 {dimension_numbers = #tpu.dot_dimension_numbers<[1], [0], [0], [1], [0, 0, 1, 1], [], []>} : vector<8x8xbf16>, vector<8x8xbf16>, vector<8x8xf32> -> vector<8x8xf32>
    %74 = arith.truncf %73 : vector<8x8xf32> to vector<8x8xbf16>
    %c0_43 = arith.constant 0 : index
    %c16_44 = arith.constant 16 : index
    %75 = vector.load %arg23[%c0_43, %c16_44] : memref<8x32xbf16, #tpu.memory_space<vmem>>, vector<8x8xbf16>
    tpu.vector_store %arg23[%c0_43, %c16_44], %74 {strides = array<i32>} : memref<8x32xbf16, #tpu.memory_space<vmem>>, vector<8x8xbf16>,
    %c0_45 = arith.constant 0 : index
    %c24 = arith.constant 24 : index
    %76 = vector.load %arg22[%c0_45, %c24] : memref<8x32xbf16, #tpu.memory_space<vmem>>, vector<8x8xbf16>
    %c0_46 = arith.constant 0 : index
    %c24_47 = arith.constant 24 : index
    %77 = vector.load %arg20[%c0_46, %c24_47] : memref<8x32xbf16, #tpu.memory_space<vmem>>, vector<8x8xbf16>
    %c0_48 = arith.constant 0 : index
    %c24_49 = arith.constant 24 : index
    %78 = vector.load %arg21[%c0_48, %c24_49] : memref<8x32xbf16, #tpu.memory_space<vmem>>, vector<8x8xbf16>
    %cst_50 = arith.constant dense<0.000000e+00> : vector<8x8xf32>
    %79 = tpu.matmul %76, %77, %cst_50 {dimension_numbers = #tpu.dot_dimension_numbers<[1], [1], [0], [0], [0, 0, 1, 0], [], []>} : vector<8x8xbf16>, vector<8x8xbf16>, vector<8x8xf32> -> vector<8x8xf32>
    %cst_51 = arith.constant 0.353553385 : f32
    %80 = vector.broadcast %cst_51 : f32 to vector<8x8xf32>
    %81 = arith.mulf %79, %80 : vector<8x8xf32>
    %cst_52 = arith.constant dense<0xFF800000> : vector<8xf32>
    %82 = vector.multi_reduction <maximumf>, %81, %cst_52 [1] : vector<8x8xf32> to vector<8xf32>
    %83 = vector.shape_cast %82 : vector<8xf32> to vector<8x1xf32>
    %84 = vector.broadcast %83 : vector<8x1xf32> to vector<8x8xf32>
    %85 = arith.subf %81, %84 : vector<8x8xf32>
    %86 = math.exp %85 : vector<8x8xf32>
    %cst_53 = arith.constant dense<0.000000e+00> : vector<8xf32>
    %87 = vector.multi_reduction <add>, %86, %cst_53 [1] : vector<8x8xf32> to vector<8xf32>
    %88 = vector.shape_cast %87 : vector<8xf32> to vector<8x1xf32>
    %89 = tpu.reciprocal %88 {approx = true} : vector<8x1xf32> -> vector<8x1xf32>
    %90 = vector.broadcast %89 : vector<8x1xf32> to vector<8x8xf32>
    %91 = arith.mulf %86, %90 : vector<8x8xf32>
    %92 = arith.truncf %91 : vector<8x8xf32> to vector<8x8xbf16>
    %cst_54 = arith.constant dense<0.000000e+00> : vector<8x8xf32>
    %93 = tpu.matmul %92, %78, %cst_54 {dimension_numbers = #tpu.dot_dimension_numbers<[1], [0], [0], [1], [0, 0, 1, 1], [], []>} : vector<8x8xbf16>, vector<8x8xbf16>, vector<8x8xf32> -> vector<8x8xf32>
    %94 = arith.truncf %93 : vector<8x8xf32> to vector<8x8xbf16>
    %c0_55 = arith.constant 0 : index
    %c24_56 = arith.constant 24 : index
    %95 = vector.load %arg23[%c0_55, %c24_56] : memref<8x32xbf16, #tpu.memory_space<vmem>>, vector<8x8xbf16>
    tpu.vector_store %arg23[%c0_55, %c24_56], %94 {strides = array<i32>} : memref<8x32xbf16, #tpu.memory_space<vmem>>, vector<8x8xbf16>,
    %c0_57 = arith.constant 0 : index
    %c0_58 = arith.constant 0 : index
    %96 = vector.load %arg23[%c0_57, %c0_58] : memref<8x32xbf16, #tpu.memory_space<vmem>>, vector<8x32xbf16>
    %c0_59 = arith.constant 0 : index
    %c0_60 = arith.constant 0 : index
    %97 = vector.load %arg9[%c0_59, %c0_60] : memref<32x32xbf16, #tpu.memory_space<vmem>>, vector<32x32xbf16>
    %cst_61 = arith.constant dense<0.000000e+00> : vector<8x32xf32>
    %98 = tpu.matmul %96, %97, %cst_61 {dimension_numbers = #tpu.dot_dimension_numbers<[1], [0], [0], [1], [0, 0, 1, 1], [], []>} : vector<8x32xbf16>, vector<32x32xbf16>, vector<8x32xf32> -> vector<8x32xf32>
    %c0_62 = arith.constant 0 : index
    %c0_63 = arith.constant 0 : index
    %99 = vector.load %arg10[%c0_62, %c0_63] : memref<1x32xf32, #tpu.memory_space<vmem>>, vector<1x32xf32>
    %100 = vector.broadcast %99 : vector<1x32xf32> to vector<8x32xf32>
    %101 = arith.addf %98, %100 : vector<8x32xf32>
    %102 = arith.addf %101, %7 : vector<8x32xf32>
    %c0_64 = arith.constant 0 : index
    %c0_65 = arith.constant 0 : index
    %103 = vector.load %arg11[%c0_64, %c0_65] : memref<1x32xf32, #tpu.memory_space<vmem>>, vector<1x32xf32>
    %c0_66 = arith.constant 0 : index
    %c0_67 = arith.constant 0 : index
    %104 = vector.load %arg12[%c0_66, %c0_67] : memref<1x32xf32, #tpu.memory_space<vmem>>, vector<1x32xf32>
    %cst_68 = arith.constant dense<0.000000e+00> : vector<8xf32>
    %105 = vector.multi_reduction <add>, %102, %cst_68 [1] : vector<8x32xf32> to vector<8xf32>
    %106 = vector.shape_cast %105 : vector<8xf32> to vector<8x1xf32>
    %cst_69 = arith.constant 3.200000e+01 : f32
    %107 = vector.broadcast %cst_69 : f32 to vector<8x1xf32>
    %108 = arith.divf %106, %107 : vector<8x1xf32>
    %109 = vector.broadcast %108 : vector<8x1xf32> to vector<8x32xf32>
    %110 = arith.subf %102, %109 : vector<8x32xf32>
    %111 = vector.broadcast %108 : vector<8x1xf32> to vector<8x32xf32>
    %112 = arith.subf %102, %111 : vector<8x32xf32>
    %113 = arith.mulf %110, %112 : vector<8x32xf32>
    %cst_70 = arith.constant dense<0.000000e+00> : vector<8xf32>
    %114 = vector.multi_reduction <add>, %113, %cst_70 [1] : vector<8x32xf32> to vector<8xf32>
    %115 = vector.shape_cast %114 : vector<8xf32> to vector<8x1xf32>
    %cst_71 = arith.constant 3.200000e+01 : f32
    %116 = vector.broadcast %cst_71 : f32 to vector<8x1xf32>
    %117 = arith.divf %115, %116 : vector<8x1xf32>
    %cst_72 = arith.constant 9.99999974E-6 : f32
    %118 = vector.broadcast %cst_72 : f32 to vector<8x1xf32>
    %119 = arith.addf %117, %118 : vector<8x1xf32>
    %120 = math.rsqrt %119 : vector<8x1xf32>
    %121 = vector.broadcast %108 : vector<8x1xf32> to vector<8x32xf32>
    %122 = arith.subf %102, %121 : vector<8x32xf32>
    %123 = vector.broadcast %120 : vector<8x1xf32> to vector<8x32xf32>
    %124 = arith.mulf %122, %123 : vector<8x32xf32>
    %125 = vector.broadcast %103 : vector<1x32xf32> to vector<8x32xf32>
    %126 = arith.mulf %124, %125 : vector<8x32xf32>
    %127 = vector.broadcast %104 : vector<1x32xf32> to vector<8x32xf32>
    %128 = arith.addf %126, %127 : vector<8x32xf32>
    %129 = arith.truncf %128 : vector<8x32xf32> to vector<8x32xbf16>
    %cst_73 = arith.constant 0.000000e+00 : f32
    %130 = vector.broadcast %cst_73 : f32 to vector<8x32xf32>
    %c0_74 = arith.constant 0 : index
    %c0_75 = arith.constant 0 : index
    %131 = vector.load %arg13[%c0_74, %c0_75] : memref<32x128xbf16, #tpu.memory_space<vmem>>, vector<32x128xbf16>
    %cst_76 = arith.constant dense<0.000000e+00> : vector<8x128xf32>
    %132 = tpu.matmul %129, %131, %cst_76 {dimension_numbers = #tpu.dot_dimension_numbers<[1], [0], [0], [1], [0, 0, 1, 1], [], []>} : vector<8x32xbf16>, vector<32x128xbf16>, vector<8x128xf32> -> vector<8x128xf32>
    %c0_77 = arith.constant 0 : index
    %c0_78 = arith.constant 0 : index
    %133 = vector.load %arg14[%c0_77, %c0_78] : memref<1x128xf32, #tpu.memory_space<vmem>>, vector<1x128xf32>
    %134 = vector.broadcast %133 : vector<1x128xf32> to vector<8x128xf32>
    %135 = arith.addf %132, %134 : vector<8x128xf32>
    %cst_79 = arith.constant 0.000000e+00 : f32
    %136 = vector.broadcast %cst_79 : f32 to vector<8x128xf32>
    %137 = arith.maximumf %135, %136 : vector<8x128xf32>
    %138 = arith.truncf %137 : vector<8x128xf32> to vector<8x128xbf16>
    %c0_80 = arith.constant 0 : index
    %c0_81 = arith.constant 0 : index
    %139 = vector.load %arg15[%c0_80, %c0_81] : memref<128x32xbf16, #tpu.memory_space<vmem>>, vector<128x32xbf16>
    %cst_82 = arith.constant dense<0.000000e+00> : vector<8x32xf32>
    %140 = tpu.matmul %138, %139, %cst_82 {dimension_numbers = #tpu.dot_dimension_numbers<[1], [0], [0], [1], [0, 0, 1, 1], [], []>} : vector<8x128xbf16>, vector<128x32xbf16>, vector<8x32xf32> -> vector<8x32xf32>
    %141 = arith.addf %130, %140 : vector<8x32xf32>
    %c0_83 = arith.constant 0 : index
    %c0_84 = arith.constant 0 : index
    %142 = vector.load %arg16[%c0_83, %c0_84] : memref<1x32xf32, #tpu.memory_space<vmem>>, vector<1x32xf32>
    %143 = vector.broadcast %142 : vector<1x32xf32> to vector<8x32xf32>
    %144 = arith.addf %141, %143 : vector<8x32xf32>
    %145 = arith.addf %144, %128 : vector<8x32xf32>
    %c0_85 = arith.constant 0 : index
    %c0_86 = arith.constant 0 : index
    %146 = vector.load %arg17[%c0_85, %c0_86] : memref<1x32xf32, #tpu.memory_space<vmem>>, vector<1x32xf32>
    %c0_87 = arith.constant 0 : index
    %c0_88 = arith.constant 0 : index
    %147 = vector.load %arg18[%c0_87, %c0_88] : memref<1x32xf32, #tpu.memory_space<vmem>>, vector<1x32xf32>
    %cst_89 = arith.constant dense<0.000000e+00> : vector<8xf32>
    %148 = vector.multi_reduction <add>, %145, %cst_89 [1] : vector<8x32xf32> to vector<8xf32>
    %149 = vector.shape_cast %148 : vector<8xf32> to vector<8x1xf32>
    %cst_90 = arith.constant 3.200000e+01 : f32
    %150 = vector.broadcast %cst_90 : f32 to vector<8x1xf32>
    %151 = arith.divf %149, %150 : vector<8x1xf32>
    %152 = vector.broadcast %151 : vector<8x1xf32> to vector<8x32xf32>
    %153 = arith.subf %145, %152 : vector<8x32xf32>
    %154 = vector.broadcast %151 : vector<8x1xf32> to vector<8x32xf32>
    %155 = arith.subf %145, %154 : vector<8x32xf32>
    %156 = arith.mulf %153, %155 : vector<8x32xf32>
    %cst_91 = arith.constant dense<0.000000e+00> : vector<8xf32>
    %157 = vector.multi_reduction <add>, %156, %cst_91 [1] : vector<8x32xf32> to vector<8xf32>
    %158 = vector.shape_cast %157 : vector<8xf32> to vector<8x1xf32>
    %cst_92 = arith.constant 3.200000e+01 : f32
    %159 = vector.broadcast %cst_92 : f32 to vector<8x1xf32>
    %160 = arith.divf %158, %159 : vector<8x1xf32>
    %cst_93 = arith.constant 9.99999974E-6 : f32
    %161 = vector.broadcast %cst_93 : f32 to vector<8x1xf32>
    %162 = arith.addf %160, %161 : vector<8x1xf32>
    %163 = math.rsqrt %162 : vector<8x1xf32>
    %164 = vector.broadcast %151 : vector<8x1xf32> to vector<8x32xf32>
    %165 = arith.subf %145, %164 : vector<8x32xf32>
    %166 = vector.broadcast %163 : vector<8x1xf32> to vector<8x32xf32>
    %167 = arith.mulf %165, %166 : vector<8x32xf32>
    %168 = vector.broadcast %146 : vector<1x32xf32> to vector<8x32xf32>
    %169 = arith.mulf %167, %168 : vector<8x32xf32>
    %170 = vector.broadcast %147 : vector<1x32xf32> to vector<8x32xf32>
    %171 = arith.addf %169, %170 : vector<8x32xf32>
    %c0_94 = arith.constant 0 : index
    %c0_95 = arith.constant 0 : index
    %c0_96 = arith.constant 0 : index
    %172 = vector.load %arg19[%c0_94, %c0_95, %c0_96] : memref<1x8x32xf32, #tpu.memory_space<vmem>>, vector<1x8x32xf32>
    %173 = vector.shape_cast %172 : vector<1x8x32xf32> to vector<8x32xf32>
    %174 = vector.shape_cast %171 : vector<8x32xf32> to vector<1x8x32xf32>
    tpu.vector_store %arg19[%c0_94, %c0_95, %c0_96], %174 {strides = array<i32>} : memref<1x8x32xf32, #tpu.memory_space<vmem>>, vector<1x8x32xf32>,
    return
  }
  func.func @transform_0(%arg0: i32, %arg1: i32) -> (i32, i32, i32) {
    %c0_i32 = arith.constant 0 : i32
    %c0_i32_0 = arith.constant 0 : i32
    %c0_i32_1 = arith.constant 0 : i32
    return %arg0, %c0_i32, %c0_i32_0 : i32, i32, i32
  }
  func.func @transform_1(%arg0: i32, %arg1: i32) -> (i32, i32) {
    %c0_i32 = arith.constant 0 : i32
    %c0_i32_0 = arith.constant 0 : i32
    %c0_i32_1 = arith.constant 0 : i32
    return %c0_i32, %c0_i32_0 : i32, i32
  }
  func.func @transform_2(%arg0: i32, %arg1: i32) -> (i32, i32) {
    %c0_i32 = arith.constant 0 : i32
    %c0_i32_0 = arith.constant 0 : i32
    %c0_i32_1 = arith.constant 0 : i32
    return %c0_i32, %c0_i32_0 : i32, i32
  }
  func.func @transform_3(%arg0: i32, %arg1: i32) -> (i32, i32) {
    %c0_i32 = arith.constant 0 : i32
    %c0_i32_0 = arith.constant 0 : i32
    %c0_i32_1 = arith.constant 0 : i32
    return %c0_i32, %c0_i32_0 : i32, i32
  }
  func.func @transform_4(%arg0: i32, %arg1: i32) -> (i32, i32) {
    %c0_i32 = arith.constant 0 : i32
    %c0_i32_0 = arith.constant 0 : i32
    %c0_i32_1 = arith.constant 0 : i32
    return %c0_i32, %c0_i32_0 : i32, i32
  }
  func.func @transform_5(%arg0: i32, %arg1: i32) -> (i32, i32) {
    %c0_i32 = arith.constant 0 : i32
    %c0_i32_0 = arith.constant 0 : i32
    %c0_i32_1 = arith.constant 0 : i32
    return %c0_i32, %c0_i32_0 : i32, i32
  }
  func.func @transform_6(%arg0: i32, %arg1: i32) -> (i32, i32) {
    %c0_i32 = arith.constant 0 : i32
    %c0_i32_0 = arith.constant 0 : i32
    %c0_i32_1 = arith.constant 0 : i32
    return %c0_i32, %c0_i32_0 : i32, i32
  }
  func.func @transform_7(%arg0: i32, %arg1: i32) -> (i32, i32) {
    %c0_i32 = arith.constant 0 : i32
    %c0_i32_0 = arith.constant 0 : i32
    %c0_i32_1 = arith.constant 0 : i32
    return %c0_i32, %c0_i32_0 : i32, i32
  }
  func.func @transform_8(%arg0: i32, %arg1: i32) -> (i32, i32) {
    %c0_i32 = arith.constant 0 : i32
    %c0_i32_0 = arith.constant 0 : i32
    %c0_i32_1 = arith.constant 0 : i32
    return %c0_i32, %c0_i32_0 : i32, i32
  }
  func.func @transform_9(%arg0: i32, %arg1: i32) -> (i32, i32) {
    %c0_i32 = arith.constant 0 : i32
    %c0_i32_0 = arith.constant 0 : i32
    %c0_i32_1 = arith.constant 0 : i32
    return %c0_i32, %c0_i32_0 : i32, i32
  }
  func.func @transform_10(%arg0: i32, %arg1: i32) -> (i32, i32) {
    %c0_i32 = arith.constant 0 : i32
    %c0_i32_0 = arith.constant 0 : i32
    %c0_i32_1 = arith.constant 0 : i32
    return %c0_i32, %c0_i32_0 : i32, i32
  }
  func.func @transform_11(%arg0: i32, %arg1: i32) -> (i32, i32) {
    %c0_i32 = arith.constant 0 : i32
    %c0_i32_0 = arith.constant 0 : i32
    %c0_i32_1 = arith.constant 0 : i32
    return %c0_i32, %c0_i32_0 : i32, i32
  }
  func.func @transform_12(%arg0: i32, %arg1: i32) -> (i32, i32) {
    %c0_i32 = arith.constant 0 : i32
    %c0_i32_0 = arith.constant 0 : i32
    %c0_i32_1 = arith.constant 0 : i32
    return %c0_i32, %c0_i32_0 : i32, i32
  }
  func.func @transform_13(%arg0: i32, %arg1: i32) -> (i32, i32) {
    %c0_i32 = arith.constant 0 : i32
    %c0_i32_0 = arith.constant 0 : i32
    %c0_i32_1 = arith.constant 0 : i32
    return %c0_i32, %c0_i32_0 : i32, i32
  }
  func.func @transform_14(%arg0: i32, %arg1: i32) -> (i32, i32) {
    %c0_i32 = arith.constant 0 : i32
    %c0_i32_0 = arith.constant 0 : i32
    %c0_i32_1 = arith.constant 0 : i32
    return %c0_i32, %c0_i32_0 : i32, i32
  }
  func.func @transform_15(%arg0: i32, %arg1: i32) -> (i32, i32) {
    %c0_i32 = arith.constant 0 : i32
    %c0_i32_0 = arith.constant 0 : i32
    %c0_i32_1 = arith.constant 0 : i32
    return %c0_i32, %c0_i32_0 : i32, i32
  }
  func.func @transform_16(%arg0: i32, %arg1: i32) -> (i32, i32) {
    %c0_i32 = arith.constant 0 : i32
    %c0_i32_0 = arith.constant 0 : i32
    %c0_i32_1 = arith.constant 0 : i32
    return %c0_i32, %c0_i32_0 : i32, i32
  }
  func.func @transform_17(%arg0: i32, %arg1: i32) -> (i32, i32, i32) {
    %c0_i32 = arith.constant 0 : i32
    %c0_i32_0 = arith.constant 0 : i32
    return %arg0, %arg1, %c0_i32 : i32, i32, i32
  }
}

</mosaic_0001>

<llo_original>
// kernel: tpu_custom_call.1
$region0: #{tpu_custom_call.1}
  #allocation0 [shape = 'u32[]', space=smem, size = 0x4, offset = 0x4, fixed_abs, tag = 'smem constant byte address 0x4 - core index']
  #allocation1 [shape = 'u32[144,128]{1,0:T(1,128)}', space=vmem, size = 0x12000, scoped, tag = 'internal scratch']
  #allocation2 [shape = 'bf16[8,32]{1,0:T(8,128)(2,1)}', space=vmem, size = 0x800, scoped, tag = 'scratch operand']
  #allocation3 [shape = 'bf16[8,32]{1,0:T(8,128)(2,1)}', space=vmem, size = 0x800, scoped, tag = 'scratch operand']
  #allocation4 [shape = 'bf16[8,32]{1,0:T(8,128)(2,1)}', space=vmem, size = 0x800, scoped, tag = 'scratch operand']
  #allocation5 [shape = 'bf16[8,32]{1,0:T(8,128)(2,1)}', space=vmem, size = 0x800, scoped, tag = 'scratch operand']
  %s0 = inlined_call_operand.vmem [shape: f32[2,8,32], index: 0, kind: input, shape index: {}]
  %s1 = inlined_call_operand.vmem [shape: bf16[32,32], index: 1, kind: input, shape index: {}]
  %s2 = inlined_call_operand.vmem [shape: f32[1,32], index: 2, kind: input, shape index: {}]
  %s3 = inlined_call_operand.vmem [shape: bf16[32,32], index: 3, kind: input, shape index: {}]
  %s4 = inlined_call_operand.vmem [shape: f32[1,32], index: 4, kind: input, shape index: {}]
  %s5 = inlined_call_operand.vmem [shape: bf16[32,32], index: 5, kind: input, shape index: {}]
  %s6 = inlined_call_operand.vmem [shape: f32[1,32], index: 6, kind: input, shape index: {}]
  %s7 = inlined_call_operand.vmem [shape: bf16[32,32], index: 7, kind: input, shape index: {}]
  %s8 = inlined_call_operand.vmem [shape: f32[1,32], index: 8, kind: input, shape index: {}]
  %s9 = inlined_call_operand.vmem [shape: f32[1,32], index: 9, kind: input, shape index: {}]
  %s10 = inlined_call_operand.vmem [shape: f32[1,32], index: 10, kind: input, shape index: {}]
  %s11 = inlined_call_operand.hbm [shape: bf16[32,128], index: 11, kind: input, shape index: {}]
  %s12 = inlined_call_operand.vmem [shape: f32[1,128], index: 12, kind: input, shape index: {}]
  %s13 = inlined_call_operand.vmem [shape: bf16[128,32], index: 13, kind: input, shape index: {}]
  %s14 = inlined_call_operand.vmem [shape: f32[1,32], index: 14, kind: input, shape index: {}]
  %s15 = inlined_call_operand.vmem [shape: f32[1,32], index: 15, kind: input, shape index: {}]
  %s16 = inlined_call_operand.vmem [shape: f32[1,32], index: 16, kind: input, shape index: {}]
  %s17 = inlined_call_operand.hbm [shape: f32[2,8,32], index: 17, kind: output, shape index: {}]
  %s18 = sld [smem:[#allocation0]]
  $region109: #{tpu_custom_call.1} parent=0
    _
  %s20 = ssub.s32 1, %s18
  %s21 = scalar_select 0, %s20, %s18
  $region1: #{tpu_custom_call.1} parent=0
    #allocation6 [shape = 'u8[8192]{0}', space=vmem, size = 0x2000, scoped, tag = 'input window, operand 11, single buffered']
    #allocation7 [shape = 's32[2]{0}', space=sflag, size = 0x8, scoped, tag = 'scoped memory for tpu_custom_call.1']
    #allocation8 [shape = 's32[2]{0}', space=sflag, size = 0x8, scoped, tag = 'scoped memory for tpu_custom_call.1']
    #allocation9 [shape = 'u8[8192]{0}', space=vmem, size = 0x2000, scoped, tag = 'output window, operand 0']
    %22 = vsyncpa [#allocation7], 0
    %23 = vsyncpa [#allocation8], 0
    %s24 = scalar_lea.sflag [#allocation8], 1
    %25 = vsyncpa %s24, 0
    loop: start=0, step=1, limit=4
    $region2: #{tpu_custom_call.1} parent=1 // loop_pre_header
      _
    $region3: #{tpu_custom_call.1} parent=1 // loop_header
      %s27 = sphi 0, %s31
      %p28 = scmp.ge.s32.totalorder %s27, 4
      %s34 = sphi 0, %s46
      %s35 = sphi 0, %s42
      %s36 = sphi 0, %s34
      %s37 = sphi 0, %s35
      %s38 = sphi 0, %s36
      %s39 = sphi 0, %s37
      %s49 = sphi 0, %s51
      %s52 = sphi 0, %s49
      %s53 = sphi 0, %s52
      %s69 = sphi 0, %s53
      %s73 = sphi 0, %s73
      %s75 = sphi 0, %s73
      %s76 = sphi 0, %s75
      %s90 = sphi 0, %s76
      %s94 = sphi 0, %s94
      %s96 = sphi 0, %s94
      %s97 = sphi 0, %s96
      %s111 = sphi 0, %s97
      %s115 = sphi 0, %s115
      %s117 = sphi 0, %s115
      %s118 = sphi 0, %s117
      %s132 = sphi 0, %s118
      %s136 = sphi 0, %s136
      %s138 = sphi 0, %s136
      %s139 = sphi 0, %s138
      %s153 = sphi 0, %s139
      %s157 = sphi 0, %s157
      %s159 = sphi 0, %s157
      %s160 = sphi 0, %s159
      %s174 = sphi 0, %s160
      %s178 = sphi 0, %s178
      %s180 = sphi 0, %s178
      %s181 = sphi 0, %s180
      %s195 = sphi 0, %s181
      %s199 = sphi 0, %s199
      %s201 = sphi 0, %s199
      %s202 = sphi 0, %s201
      %s216 = sphi 0, %s202
      %s220 = sphi 0, %s220
      %s222 = sphi 0, %s220
      %s223 = sphi 0, %s222
      %s237 = sphi 0, %s223
      %s241 = sphi 0, %s241
      %s243 = sphi 0, %s241
      %s244 = sphi 0, %s243
      %s258 = sphi 0, %s244
      %s262 = sphi 0, %s262
      %s264 = sphi 0, %s262
      %s265 = sphi 0, %s264
      %s279 = sphi 0, %s265
      %s283 = sphi 0, %s283
      %s285 = sphi 0, %s283
      %s286 = sphi 0, %s285
      %s300 = sphi 0, %s286
      %s304 = sphi 0, %s304
      %s306 = sphi 0, %s304
      %s307 = sphi 0, %s306
      %s321 = sphi 0, %s307
      %s325 = sphi 0, %s325
      %s327 = sphi 0, %s325
      %s328 = sphi 0, %s327
      %s342 = sphi 0, %s328
      %s346 = sphi 0, %s346
      %s348 = sphi 0, %s346
      %s349 = sphi 0, %s348
      %s363 = sphi 0, %s349
      %s367 = sphi 0, %s367
      %s369 = sphi 0, %s367
      %s370 = sphi 0, %s369
      %s384 = sphi 0, %s370
      %s388 = sphi 0, %s388
      %s390 = sphi 0, %s388
      %s391 = sphi 0, %s390
      %s405 = sphi 0, %s391
      %s413 = sphi 0, %s415
      %s416 = sphi 0, %s413
      %s417 = sphi 0, %s416
      %s433 = sphi 0, %s417
    $region4: #{tpu_custom_call.1} parent=1 // loop_header_branch
      %30 = sbr.rel (%p28) target = $region8
    $region5: #{tpu_custom_call.1} parent=1 // loop_body
      %s32 = ssub.s32 %s27, 1
      %s33 = ssub.s32 %s27, 2
      %s40 = sadd.s32 1, %s35
      %p41 = scmp.ge.s32.totalorder %s40, 1
      %s42 = scalar_select %p41, 0, %s40
      %s43 = sadd.s32 1, %s34
      %s44 = scalar_select %p41, %s43, %s34
      %p45 = scmp.ge.s32.totalorder %s44, 2
      %s46 = scalar_select %p45, 0, %s44
      %s47 = ssub.s32 %s34, %s46
      %p48 = scmp.eq.s32.totalorder %s47, 0
      %s50 = sadd.s32 %s49, 1
      %s51 = scalar_select %p48, %s49, %s50
      %p54 = pneg %p48
      %p55 = scmp.eq.s32.totalorder %s27, 1
      %p56 = por %p54, %p55
      %p57 = scmp.ne.s32.totalorder %s49, %s52
      %p58 = scmp.eq.s32.totalorder %s27, 0
      %p59 = por %p57, %p58
      %p60 = scmp.ne.s32.totalorder %s49, %s52
      %p61 = scmp.eq.s32.totalorder %s32, 1
      %p62 = por %p60, %p61
      %p63 = scmp.ne.s32.totalorder %s52, %s53
      %p64 = scmp.eq.s32.totalorder %s32, 0
      %p65 = por %p63, %p64
      %p66 = scmp.ne.s32.totalorder %s52, %s53
      %p67 = scmp.eq.s32.totalorder %s33, 1
      %p68 = por %p66, %p67
      %p70 = scmp.ne.s32.totalorder %s53, %s69
      %p71 = scmp.eq.s32.totalorder %s33, 0
      %p72 = por %p70, %p71
      %s74 = sadd.s32 %s73, 1
      %p77 = scmp.eq.s32.totalorder %s27, 1
      %p78 = scmp.ne.s32.totalorder %s73, %s75
      %p79 = scmp.eq.s32.totalorder %s27, 0
      %p80 = por %p78, %p79
      %p81 = scmp.ne.s32.totalorder %s73, %s75
      %p82 = scmp.eq.s32.totalorder %s32, 1
      %p83 = por %p81, %p82
      %p84 = scmp.ne.s32.totalorder %s75, %s76
      %p85 = scmp.eq.s32.totalorder %s32, 0
      %p86 = por %p84, %p85
      %p87 = scmp.ne.s32.totalorder %s75, %s76
      %p88 = scmp.eq.s32.totalorder %s33, 1
      %p89 = por %p87, %p88
      %p91 = scmp.ne.s32.totalorder %s76, %s90
      %p92 = scmp.eq.s32.totalorder %s33, 0
      %p93 = por %p91, %p92
      %s95 = sadd.s32 %s94, 1
      %p98 = scmp.eq.s32.totalorder %s27, 1
      %p99 = scmp.ne.s32.totalorder %s94, %s96
      %p100 = scmp.eq.s32.totalorder %s27, 0
      %p101 = por %p99, %p100
      %p102 = scmp.ne.s32.totalorder %s94, %s96
      %p103 = scmp.eq.s32.totalorder %s32, 1
      %p104 = por %p102, %p103
      %p105 = scmp.ne.s32.totalorder %s96, %s97
      %p106 = scmp.eq.s32.totalorder %s32, 0
      %p107 = por %p105, %p106
      %p108 = scmp.ne.s32.totalorder %s96, %s97
      %p109 = scmp.eq.s32.totalorder %s33, 1
      %p110 = por %p108, %p109
      %p112 = scmp.ne.s32.totalorder %s97, %s111
      %p113 = scmp.eq.s32.totalorder %s33, 0
      %p114 = por %p112, %p113
      %s116 = sadd.s32 %s115, 1
      %p119 = scmp.eq.s32.totalorder %s27, 1
      %p120 = scmp.ne.s32.totalorder %s115, %s117
      %p121 = scmp.eq.s32.totalorder %s27, 0
      %p122 = por %p120, %p121
      %p123 = scmp.ne.s32.totalorder %s115, %s117
      %p124 = scmp.eq.s32.totalorder %s32, 1
      %p125 = por %p123, %p124
      %p126 = scmp.ne.s32.totalorder %s117, %s118
      %p127 = scmp.eq.s32.totalorder %s32, 0
      %p128 = por %p126, %p127
      %p129 = scmp.ne.s32.totalorder %s117, %s118
      %p130 = scmp.eq.s32.totalorder %s33, 1
      %p131 = por %p129, %p130
      %p133 = scmp.ne.s32.totalorder %s118, %s132
      %p134 = scmp.eq.s32.totalorder %s33, 0
      %p135 = por %p133, %p134
      %s137 = sadd.s32 %s136, 1
      %p140 = scmp.eq.s32.totalorder %s27, 1
      %p141 = scmp.ne.s32.totalorder %s136, %s138
      %p142 = scmp.eq.s32.totalorder %s27, 0
      %p143 = por %p141, %p142
      %p144 = scmp.ne.s32.totalorder %s136, %s138
      %p145 = scmp.eq.s32.totalorder %s32, 1
      %p146 = por %p144, %p145
      %p147 = scmp.ne.s32.totalorder %s138, %s139
      %p148 = scmp.eq.s32.totalorder %s32, 0
      %p149 = por %p147, %p148
      %p150 = scmp.ne.s32.totalorder %s138, %s139
      %p151 = scmp.eq.s32.totalorder %s33, 1
      %p152 = por %p150, %p151
      %p154 = scmp.ne.s32.totalorder %s139, %s153
      %p155 = scmp.eq.s32.totalorder %s33, 0
      %p156 = por %p154, %p155
      %s158 = sadd.s32 %s157, 1
      %p161 = scmp.eq.s32.totalorder %s27, 1
      %p162 = scmp.ne.s32.totalorder %s157, %s159
      %p163 = scmp.eq.s32.totalorder %s27, 0
      %p164 = por %p162, %p163
      %p165 = scmp.ne.s32.totalorder %s157, %s159
      %p166 = scmp.eq.s32.totalorder %s32, 1
      %p167 = por %p165, %p166
      %p168 = scmp.ne.s32.totalorder %s159, %s160
      %p169 = scmp.eq.s32.totalorder %s32, 0
      %p170 = por %p168, %p169
      %p171 = scmp.ne.s32.totalorder %s159, %s160
      %p172 = scmp.eq.s32.totalorder %s33, 1
      %p173 = por %p171, %p172
      %p175 = scmp.ne.s32.totalorder %s160, %s174
      %p176 = scmp.eq.s32.totalorder %s33, 0
      %p177 = por %p175, %p176
      %s179 = sadd.s32 %s178, 1
      %p182 = scmp.eq.s32.totalorder %s27, 1
      %p183 = scmp.ne.s32.totalorder %s178, %s180
      %p184 = scmp.eq.s32.totalorder %s27, 0
      %p185 = por %p183, %p184
      %p186 = scmp.ne.s32.totalorder %s178, %s180
      %p187 = scmp.eq.s32.totalorder %s32, 1
      %p188 = por %p186, %p187
      %p189 = scmp.ne.s32.totalorder %s180, %s181
      %p190 = scmp.eq.s32.totalorder %s32, 0
      %p191 = por %p189, %p190
      %p192 = scmp.ne.s32.totalorder %s180, %s181
      %p193 = scmp.eq.s32.totalorder %s33, 1
      %p194 = por %p192, %p193
      %p196 = scmp.ne.s32.totalorder %s181, %s195
      %p197 = scmp.eq.s32.totalorder %s33, 0
      %p198 = por %p196, %p197
      %s200 = sadd.s32 %s199, 1
      %p203 = scmp.eq.s32.totalorder %s27, 1
      %p204 = scmp.ne.s32.totalorder %s199, %s201
      %p205 = scmp.eq.s32.totalorder %s27, 0
      %p206 = por %p204, %p205
      %p207 = scmp.ne.s32.totalorder %s199, %s201
      %p208 = scmp.eq.s32.totalorder %s32, 1
      %p209 = por %p207, %p208
      %p210 = scmp.ne.s32.totalorder %s201, %s202
      %p211 = scmp.eq.s32.totalorder %s32, 0
      %p212 = por %p210, %p211
      %p213 = scmp.ne.s32.totalorder %s201, %s202
      %p214 = scmp.eq.s32.totalorder %s33, 1
      %p215 = por %p213, %p214
      %p217 = scmp.ne.s32.totalorder %s202, %s216
      %p218 = scmp.eq.s32.totalorder %s33, 0
      %p219 = por %p217, %p218
      %s221 = sadd.s32 %s220, 1
      %p224 = scmp.eq.s32.totalorder %s27, 1
      %p225 = scmp.ne.s32.totalorder %s220, %s222
      %p226 = scmp.eq.s32.totalorder %s27, 0
      %p227 = por %p225, %p226
      %p228 = scmp.ne.s32.totalorder %s220, %s222
      %p229 = scmp.eq.s32.totalorder %s32, 1
      %p230 = por %p228, %p229
      %p231 = scmp.ne.s32.totalorder %s222, %s223
      %p232 = scmp.eq.s32.totalorder %s32, 0
      %p233 = por %p231, %p232
      %p234 = scmp.ne.s32.totalorder %s222, %s223
      %p235 = scmp.eq.s32.totalorder %s33, 1
      %p236 = por %p234, %p235
      %p238 = scmp.ne.s32.totalorder %s223, %s237
      %p239 = scmp.eq.s32.totalorder %s33, 0
      %p240 = por %p238, %p239
      %s242 = sadd.s32 %s241, 1
      %p245 = scmp.eq.s32.totalorder %s27, 1
      %p246 = scmp.ne.s32.totalorder %s241, %s243
      %p247 = scmp.eq.s32.totalorder %s27, 0
      %p248 = por %p246, %p247
      %p249 = scmp.ne.s32.totalorder %s241, %s243
      %p250 = scmp.eq.s32.totalorder %s32, 1
      %p251 = por %p249, %p250
      %p252 = scmp.ne.s32.totalorder %s243, %s244
      %p253 = scmp.eq.s32.totalorder %s32, 0
      %p254 = por %p252, %p253
      %p255 = scmp.ne.s32.totalorder %s243, %s244
      %p256 = scmp.eq.s32.totalorder %s33, 1
      %p257 = por %p255, %p256
      %p259 = scmp.ne.s32.totalorder %s244, %s258
      %p260 = scmp.eq.s32.totalorder %s33, 0
      %p261 = por %p259, %p260
      %s263 = sadd.s32 %s262, 1
      %p266 = scmp.eq.s32.totalorder %s27, 1
      %p267 = scmp.ne.s32.totalorder %s262, %s264
      %p268 = scmp.eq.s32.totalorder %s27, 0
      %p269 = por %p267, %p268
      %p270 = scmp.ne.s32.totalorder %s262, %s264
      %p271 = scmp.eq.s32.totalorder %s32, 1
      %p272 = por %p270, %p271
      %p273 = scmp.ne.s32.totalorder %s264, %s265
      %p274 = scmp.eq.s32.totalorder %s32, 0
      %p275 = por %p273, %p274
      %p276 = scmp.ne.s32.totalorder %s264, %s265
      %p277 = scmp.eq.s32.totalorder %s33, 1
      %p278 = por %p276, %p277
      %p280 = scmp.ne.s32.totalorder %s265, %s279
      %p281 = scmp.eq.s32.totalorder %s33, 0
      %p282 = por %p280, %p281
      %s284 = sadd.s32 %s283, 1
      %p287 = scmp.eq.s32.totalorder %s27, 1
      %p288 = scmp.ne.s32.totalorder %s283, %s285
      %p289 = scmp.eq.s32.totalorder %s27, 0
      %p290 = por %p288, %p289
      %p291 = scmp.ne.s32.totalorder %s283, %s285
      %p292 = scmp.eq.s32.totalorder %s32, 1
      %p293 = por %p291, %p292
      %p294 = scmp.ne.s32.totalorder %s285, %s286
      %p295 = scmp.eq.s32.totalorder %s32, 0
      %p296 = por %p294, %p295
      %p297 = scmp.ne.s32.totalorder %s285, %s286
      %p298 = scmp.eq.s32.totalorder %s33, 1
      %p299 = por %p297, %p298
      %p301 = scmp.ne.s32.totalorder %s286, %s300
      %p302 = scmp.eq.s32.totalorder %s33, 0
      %p303 = por %p301, %p302
      %s305 = sadd.s32 %s304, 1
      %p308 = scmp.eq.s32.totalorder %s27, 1
      %p309 = scmp.ne.s32.totalorder %s304, %s306
      %p310 = scmp.eq.s32.totalorder %s27, 0
      %p311 = por %p309, %p310
      %p312 = scmp.ne.s32.totalorder %s304, %s306
      %p313 = scmp.eq.s32.totalorder %s32, 1
      %p314 = por %p312, %p313
      %p315 = scmp.ne.s32.totalorder %s306, %s307
      %p316 = scmp.eq.s32.totalorder %s32, 0
      %p317 = por %p315, %p316
      %p318 = scmp.ne.s32.totalorder %s306, %s307
      %p319 = scmp.eq.s32.totalorder %s33, 1
      %p320 = por %p318, %p319
      %p322 = scmp.ne.s32.totalorder %s307, %s321
      %p323 = scmp.eq.s32.totalorder %s33, 0
      %p324 = por %p322, %p323
      %s326 = sadd.s32 %s325, 1
      %p329 = scmp.eq.s32.totalorder %s27, 1
      %p330 = scmp.ne.s32.totalorder %s325, %s327
      %p331 = scmp.eq.s32.totalorder %s27, 0
      %p332 = por %p330, %p331
      %p333 = scmp.ne.s32.totalorder %s325, %s327
      %p334 = scmp.eq.s32.totalorder %s32, 1
      %p335 = por %p333, %p334
      %p336 = scmp.ne.s32.totalorder %s327, %s328
      %p337 = scmp.eq.s32.totalorder %s32, 0
      %p338 = por %p336, %p337
      %p339 = scmp.ne.s32.totalorder %s327, %s328
      %p340 = scmp.eq.s32.totalorder %s33, 1
      %p341 = por %p339, %p340
      %p343 = scmp.ne.s32.totalorder %s328, %s342
      %p344 = scmp.eq.s32.totalorder %s33, 0
      %p345 = por %p343, %p344
      %s347 = sadd.s32 %s346, 1
      %p350 = scmp.eq.s32.totalorder %s27, 1
      %p351 = scmp.ne.s32.totalorder %s346, %s348
      %p352 = scmp.eq.s32.totalorder %s27, 0
      %p353 = por %p351, %p352
      %p354 = scmp.ne.s32.totalorder %s346, %s348
      %p355 = scmp.eq.s32.totalorder %s32, 1
      %p356 = por %p354, %p355
      %p357 = scmp.ne.s32.totalorder %s348, %s349
      %p358 = scmp.eq.s32.totalorder %s32, 0
      %p359 = por %p357, %p358
      %p360 = scmp.ne.s32.totalorder %s348, %s349
      %p361 = scmp.eq.s32.totalorder %s33, 1
      %p362 = por %p360, %p361
      %p364 = scmp.ne.s32.totalorder %s349, %s363
      %p365 = scmp.eq.s32.totalorder %s33, 0
      %p366 = por %p364, %p365
      %s368 = sadd.s32 %s367, 1
      %p371 = scmp.eq.s32.totalorder %s27, 1
      %p372 = scmp.ne.s32.totalorder %s367, %s369
      %p373 = scmp.eq.s32.totalorder %s27, 0
      %p374 = por %p372, %p373
      %p375 = scmp.ne.s32.totalorder %s367, %s369
      %p376 = scmp.eq.s32.totalorder %s32, 1
      %p377 = por %p375, %p376
      %p378 = scmp.ne.s32.totalorder %s369, %s370
      %p379 = scmp.eq.s32.totalorder %s32, 0
      %p380 = por %p378, %p379
      %p381 = scmp.ne.s32.totalorder %s369, %s370
      %p382 = scmp.eq.s32.totalorder %s33, 1
      %p383 = por %p381, %p382
      %p385 = scmp.ne.s32.totalorder %s370, %s384
      %p386 = scmp.eq.s32.totalorder %s33, 0
      %p387 = por %p385, %p386
      %s389 = sadd.s32 %s388, 1
      %p392 = scmp.eq.s32.totalorder %s27, 1
      %p393 = scmp.ne.s32.totalorder %s388, %s390
      %p394 = scmp.eq.s32.totalorder %s27, 0
      %p395 = por %p393, %p394
      %p396 = scmp.ne.s32.totalorder %s388, %s390
      %p397 = scmp.eq.s32.totalorder %s32, 1
      %p398 = por %p396, %p397
      %p399 = scmp.ne.s32.totalorder %s390, %s391
      %p400 = scmp.eq.s32.totalorder %s32, 0
      %p401 = por %p399, %p400
      %p402 = scmp.ne.s32.totalorder %s390, %s391
      %p403 = scmp.eq.s32.totalorder %s33, 1
      %p404 = por %p402, %p403
      %p406 = scmp.ne.s32.totalorder %s391, %s405
      %p407 = scmp.eq.s32.totalorder %s33, 0
      %p408 = por %p406, %p407
      %s409 = ssub.s32 %s34, %s46
      %s410 = ssub.s32 %s35, %s42
      %s411 = sor.u32 %s409, %s410
      %p412 = scmp.eq.s32.totalorder %s411, 0
      %s414 = sadd.s32 %s413, 1
      %s415 = scalar_select %p412, %s413, %s414
      %p418 = pneg %p412
      %p419 = scmp.eq.s32.totalorder %s27, 1
      %p420 = por %p418, %p419
      %p421 = scmp.ne.s32.totalorder %s413, %s416
      %p422 = scmp.eq.s32.totalorder %s27, 0
      %p423 = por %p421, %p422
      %p424 = scmp.ne.s32.totalorder %s413, %s416
      %p425 = scmp.eq.s32.totalorder %s32, 1
      %p426 = por %p424, %p425
      %p427 = scmp.ne.s32.totalorder %s416, %s417
      %p428 = scmp.eq.s32.totalorder %s32, 0
      %p429 = por %p427, %p428
      %p430 = scmp.ne.s32.totalorder %s416, %s417
      %p431 = scmp.eq.s32.totalorder %s33, 1
      %p432 = por %p430, %p431
      %p434 = scmp.ne.s32.totalorder %s417, %s433
      %p435 = scmp.eq.s32.totalorder %s33, 0
      %p436 = por %p434, %p435
      %p437 = scmp.le.s32.totalorder 1, %s27
      %p438 = scmp.lt.s32.totalorder %s27, 3
      %p439 = pnand %p437, %p438
      %p440 = pneg %p439
      // Predicated region
      $region9: #{tpu_custom_call.1} parent=5 // pred_check
        _
      $region10: #{tpu_custom_call.1} parent=5 // pred_check_branch
        %442 = sbr.rel (%p439) target = $region12
      $region11: #{tpu_custom_call.1} parent=5 // pred_region
        %s443 = ssub.s32 %s27, 1
        // Predicated region
        $region13: #{tpu_custom_call.1} parent=11 // pred_check
          %p444 = pneg %p86
        $region14: #{tpu_custom_call.1} parent=11 // pred_check_branch
          %446 = sbr.rel (%p444) target = $region16
        $region15: #{tpu_custom_call.1} parent=11 // pred_region
          _
        $region16: #{tpu_custom_call.1} parent=11 // pred_fallthru
          _
        // Predicated region
        $region17: #{tpu_custom_call.1} parent=11 // pred_check
          %p447 = pneg %p107
        $region18: #{tpu_custom_call.1} parent=11 // pred_check_branch
          %449 = sbr.rel (%p447) target = $region20
        $region19: #{tpu_custom_call.1} parent=11 // pred_region
          _
        $region20: #{tpu_custom_call.1} parent=11 // pred_fallthru
          _
        // Predicated region
        $region21: #{tpu_custom_call.1} parent=11 // pred_check
          %p450 = pneg %p128
        $region22: #{tpu_custom_call.1} parent=11 // pred_check_branch
          %452 = sbr.rel (%p450) target = $region24
        $region23: #{tpu_custom_call.1} parent=11 // pred_region
          _
        $region24: #{tpu_custom_call.1} parent=11 // pred_fallthru
          _
        // Predicated region
        $region25: #{tpu_custom_call.1} parent=11 // pred_check
          %p453 = pneg %p149
        $region26: #{tpu_custom_call.1} parent=11 // pred_check_branch
          %455 = sbr.rel (%p453) target = $region28
        $region27: #{tpu_custom_call.1} parent=11 // pred_region
          _
        $region28: #{tpu_custom_call.1} parent=11 // pred_fallthru
          _
        // Predicated region
        $region29: #{tpu_custom_call.1} parent=11 // pred_check
          %p456 = pneg %p170
        $region30: #{tpu_custom_call.1} parent=11 // pred_check_branch
          %458 = sbr.rel (%p456) target = $region32
        $region31: #{tpu_custom_call.1} parent=11 // pred_region
          _
        $region32: #{tpu_custom_call.1} parent=11 // pred_fallthru
          _
        // Predicated region
        $region33: #{tpu_custom_call.1} parent=11 // pred_check
          %p459 = pneg %p191
        $region34: #{tpu_custom_call.1} parent=11 // pred_check_branch
          %461 = sbr.rel (%p459) target = $region36
        $region35: #{tpu_custom_call.1} parent=11 // pred_region
          _
        $region36: #{tpu_custom_call.1} parent=11 // pred_fallthru
          _
        // Predicated region
        $region37: #{tpu_custom_call.1} parent=11 // pred_check
          %p462 = pneg %p212
        $region38: #{tpu_custom_call.1} parent=11 // pred_check_branch
          %464 = sbr.rel (%p462) target = $region40
        $region39: #{tpu_custom_call.1} parent=11 // pred_region
          _
        $region40: #{tpu_custom_call.1} parent=11 // pred_fallthru
          _
        // Predicated region
        $region41: #{tpu_custom_call.1} parent=11 // pred_check
          %p465 = pneg %p233
        $region42: #{tpu_custom_call.1} parent=11 // pred_check_branch
          %467 = sbr.rel (%p465) target = $region44
        $region43: #{tpu_custom_call.1} parent=11 // pred_region
          _
        $region44: #{tpu_custom_call.1} parent=11 // pred_fallthru
          _
        // Predicated region
        $region45: #{tpu_custom_call.1} parent=11 // pred_check
          %p468 = pneg %p254
        $region46: #{tpu_custom_call.1} parent=11 // pred_check_branch
          %470 = sbr.rel (%p468) target = $region48
        $region47: #{tpu_custom_call.1} parent=11 // pred_region
          _
        $region48: #{tpu_custom_call.1} parent=11 // pred_fallthru
          _
        // Predicated region
        $region49: #{tpu_custom_call.1} parent=11 // pred_check
          %p471 = pneg %p275
        $region50: #{tpu_custom_call.1} parent=11 // pred_check_branch
          %473 = sbr.rel (%p471) target = $region52
        $region51: #{tpu_custom_call.1} parent=11 // pred_region
          _
        $region52: #{tpu_custom_call.1} parent=11 // pred_fallthru
          _
        // Predicated region
        $region53: #{tpu_custom_call.1} parent=11 // pred_check
          %p474 = pneg %p296
        $region54: #{tpu_custom_call.1} parent=11 // pred_check_branch
          %476 = sbr.rel (%p474) target = $region56
        $region55: #{tpu_custom_call.1} parent=11 // pred_region
          %s478 = ssub.s32 256, 256
          %479 = vsyncadd [#allocation7], %s478
          %s480 = sshll.u32 [#allocation6], 4
          %s481 = int_to_ptr.vmem [resolvable:$true] %s480
          %486 = dma.hbm_to_vmem [thread:$0]  %s11, 256, %s481, [#allocation7], 64, 64, 4
        $region56: #{tpu_custom_call.1} parent=11 // pred_fallthru
          _
        // Predicated region
        $region57: #{tpu_custom_call.1} parent=11 // pred_check
          %p487 = pneg %p317
        $region58: #{tpu_custom_call.1} parent=11 // pred_check_branch
          %489 = sbr.rel (%p487) target = $region60
        $region59: #{tpu_custom_call.1} parent=11 // pred_region
          _
        $region60: #{tpu_custom_call.1} parent=11 // pred_fallthru
          _
        // Predicated region
        $region61: #{tpu_custom_call.1} parent=11 // pred_check
          %p490 = pneg %p338
        $region62: #{tpu_custom_call.1} parent=11 // pred_check_branch
          %492 = sbr.rel (%p490) target = $region64
        $region63: #{tpu_custom_call.1} parent=11 // pred_region
          _
        $region64: #{tpu_custom_call.1} parent=11 // pred_fallthru
          _
        // Predicated region
        $region65: #{tpu_custom_call.1} parent=11 // pred_check
          %p493 = pneg %p359
        $region66: #{tpu_custom_call.1} parent=11 // pred_check_branch
          %495 = sbr.rel (%p493) target = $region68
        $region67: #{tpu_custom_call.1} parent=11 // pred_region
          _
        $region68: #{tpu_custom_call.1} parent=11 // pred_fallthru
          _
        // Predicated region
        $region69: #{tpu_custom_call.1} parent=11 // pred_check
          %p496 = pneg %p380
        $region70: #{tpu_custom_call.1} parent=11 // pred_check_branch
          %498 = sbr.rel (%p496) target = $region72
        $region71: #{tpu_custom_call.1} parent=11 // pred_region
          _
        $region72: #{tpu_custom_call.1} parent=11 // pred_fallthru
          _
        // Predicated region
        $region73: #{tpu_custom_call.1} parent=11 // pred_check
          %p499 = pneg %p401
        $region74: #{tpu_custom_call.1} parent=11 // pred_check_branch
          %501 = sbr.rel (%p499) target = $region76
        $region75: #{tpu_custom_call.1} parent=11 // pred_region
          _
        $region76: #{tpu_custom_call.1} parent=11 // pred_fallthru
          _
      $region12: #{tpu_custom_call.1} parent=5 // pred_fallthru
        _
      %p502 = scmp.lt.s32.totalorder %s27, 2
      // Predicated region
      $region77: #{tpu_custom_call.1} parent=5 // pred_check
        %p503 = pneg %p502
      $region78: #{tpu_custom_call.1} parent=5 // pred_check_branch
        %505 = sbr.rel (%p503) target = $region80
      $region79: #{tpu_custom_call.1} parent=5 // pred_region
        // Predicated region
        $region81: #{tpu_custom_call.1} parent=79 // pred_check
          %p506 = pneg %p59
        $region82: #{tpu_custom_call.1} parent=79 // pred_check_branch
          %508 = sbr.rel (%p506) target = $region84
        $region83: #{tpu_custom_call.1} parent=79 // pred_region
          %p509 = scmp.lt.s32.totalorder %s34, 1
          %s510 = scalar_select %p509, %s34, 1
          %s511 = smul.addr %s510, 8
          %s512 = scalar_lea.vmem %s0, %s511
        $region84: #{tpu_custom_call.1} parent=79 // pred_fallthru
          _
      $region80: #{tpu_custom_call.1} parent=5 // pred_fallthru
        _
      %p513 = scmp.le.s32.totalorder 1, %s27
      %p514 = scmp.lt.s32.totalorder %s27, 3
      %p515 = pnand %p513, %p514
      %p516 = pneg %p515
      // Predicated region
      $region85: #{tpu_custom_call.1} parent=5 // pred_check
        _
      $region86: #{tpu_custom_call.1} parent=5 // pred_check_branch
        %518 = sbr.rel (%p515) target = $region88
      $region87: #{tpu_custom_call.1} parent=5 // pred_region
        %s519 = ssub.s32 %s27, 1
        // Predicated region
        $region89: #{tpu_custom_call.1} parent=87 // pred_check
          %p520 = pneg %p296
        $region90: #{tpu_custom_call.1} parent=87 // pred_check_branch
          %522 = sbr.rel (%p520) target = $region92
        $region91: #{tpu_custom_call.1} parent=87 // pred_region
          %523 = dma.done [#allocation7], 256
        $region92: #{tpu_custom_call.1} parent=87 // pred_fallthru
          _
        %p524 = scmp.lt.s32.totalorder %s36, 1
        %s525 = scalar_select %p524, %s36, 1
        %s526 = smul.addr %s525, 8
        %s527 = scalar_lea.vmem %s0, %s526
        %p528 = pneg %p65
        %p529 = pneg %p62
        %p530 = pneg %p86
        %p531 = pneg %p83
        %p532 = pneg %p107
        %p533 = pneg %p104
        %p534 = pneg %p128
        %p535 = pneg %p125
        %p536 = pneg %p149
        %p537 = pneg %p146
        %p538 = pneg %p170
        %p539 = pneg %p167
        %p540 = pneg %p191
        %p541 = pneg %p188
        %p542 = pneg %p212
        %p543 = pneg %p209
        %p544 = pneg %p233
        %p545 = pneg %p230
        %p546 = pneg %p254
        %p547 = pneg %p251
        %p548 = pneg %p275
        %p549 = pneg %p272
        %p550 = pneg %p296
        %p551 = pneg %p293
        %p552 = pneg %p317
        %p553 = pneg %p314
        %p554 = pneg %p338
        %p555 = pneg %p335
        %p556 = pneg %p359
        %p557 = pneg %p356
        %p558 = pneg %p380
        %p559 = pneg %p377
        %p560 = pneg %p401
        %p561 = pneg %p398
        %p562 = pneg %p429
        %p563 = pneg %p426
        %s564 = sand.u32 %s416, 1
        %s565 = scalar_lea.sflag [#allocation8], %s564
        %s566 = sand.u32 %s416, 1
        %s567 = smul.addr %s566, 8
        %s568 = scalar_lea.vmem [#allocation9], %s567
        %p569 = scmp.lt.s32.totalorder %s36, 1
        %s570 = scalar_select %p569, %s36, 1
        %s571 = smul.addr %s570, 8
        %s572 = scalar_lea.vmem %s0, %s571
        %p574 = scmp.eq.s32.totalorder %s37, 0
        // Predicated region
        $region93: #{tpu_custom_call.1} parent=87 // pred_check
          %p575 = pneg %p574
        $region94: #{tpu_custom_call.1} parent=87 // pred_check_branch
          %577 = sbr.rel (%p575) target = $region96
        $region95: #{tpu_custom_call.1} parent=87 // pred_region
          %v578 = vld [vmem:[%s572] sm:$0xff]
          %v579 = vpack.c.bf16 %v578, %v578
          %v580 = vld [vmem:[%s3] sm:$0xf]
          %v581 = vld [vmem:[%s3 + $0x4] sm:$0xf]
          %v582 = vld [vmem:[%s3 + $0x8] sm:$0xf]
          %v583 = vld [vmem:[%s3 + $0xc] sm:$0xf]
          %v584 = vld [vmem:[%s4] sm:$0x1]
          %v586 = vlaneseq
          %v587 = vshrl.u32 %v586, 7
          %v588 = vsub.s32 0, %v587
          %v589 = vrot.slane %v584, %v588
          %v595 = vunpack.c.l.b16 %v580
          %v596 = vunpack.c.l.b16 %v581
          %v597 = vunpack.c.l.b16 %v582
          %v598 = vunpack.c.l.b16 %v583
          %v599 = vpack.c.b16 %v596, %v595
          %v600 = vpack.c.b16 %v598, %v597
          %vm603 = vcmask 261120
          %v605 = vsel %vm603, %v579, 0
          %607 = vmatprep.subr.bf16.mxu0 0
          %608 = vmatpush1.bf16.msra.mxu0 0
          %609 = vmatprep.subr.bf16.mxu0 0
          %610 = vmatpush1.bf16.msra.mxu0 0
          %611 = vmatprep.subr.bf16.mxu0 0
          %612 = vmatpush1.bf16.msra.mxu0 0
          %613 = vmatprep.subr.bf16.mxu0 0
          %614 = vmatpush1.bf16.msra.mxu0 0
          %615 = vmatprep.subr.bf16.mxu0 0
          %616 = vmatpush1.bf16.msra.mxu0 0
          %617 = vmatprep.subr.bf16.mxu0 0
          %618 = vmatpush1.bf16.msra.mxu0 0
          %619 = vmatprep.subr.bf16.mxu0 0
          %620 = vmatpush1.bf16.msra.mxu0 %v600
          %621 = vmatprep.subr.bf16.mxu0 0
          %622 = vmatpush1.bf16.msra.mxu0 %v599
          %623 = vmatprep.subr.bf16.mxu0 0
          %624 = vmatpush2.bf16.msra.mxu0 0
          %625 = vmatprep.subr.bf16.mxu0 0
          %626 = vmatpush2.bf16.msra.mxu0 0
          %627 = vmatprep.subr.bf16.mxu0 0
          %628 = vmatpush2.bf16.msra.mxu0 0
          %629 = vmatprep.subr.bf16.mxu0 0
          %630 = vmatpush2.bf16.msra.mxu0 0
          %631 = vmatprep.subr.bf16.mxu0 0
          %632 = vmatpush2.bf16.msra.mxu0 0
          %633 = vmatprep.subr.bf16.mxu0 0
          %634 = vmatpush2.bf16.msra.mxu0 0
          %635 = vmatprep.subr.bf16.mxu0 0
          %636 = vmatpush2.bf16.msra.mxu0 0
          %637 = vmatprep.subr.bf16.mxu0 0
          %638 = vmatpush2.bf16.msra.mxu0 0
          %639 = vmatprep.mubr.bf16.mxu0 0
          %640 = vmatmul.mubr.bf16.gmra.mxu0 %v605
          %v641 = vpop.f32.mrf.mxu0
          %v642 = vadd.f32 %v589, %v641
          %v643 = vpop.f32.mrf.mxu0
          %v644 = vpop.f32.mrf.mxu0
          %v645 = vpop.f32.mrf.mxu0
          %646 = vdwg.mxu0
          %v647 = vld [vmem:[%s5] sm:$0xf]
          %v648 = vld [vmem:[%s5 + $0x4] sm:$0xf]
          %v649 = vld [vmem:[%s5 + $0x8] sm:$0xf]
          %v650 = vld [vmem:[%s5 + $0xc] sm:$0xf]
          %v651 = vld [vmem:[%s6] sm:$0x1]
          %v653 = vlaneseq
          %v654 = vshrl.u32 %v653, 7
          %v655 = vsub.s32 0, %v654
          %v656 = vrot.slane %v651, %v655
          %v662 = vunpack.c.l.b16 %v647
          %v663 = vunpack.c.l.b16 %v648
          %v664 = vunpack.c.l.b16 %v649
          %v665 = vunpack.c.l.b16 %v650
          %v666 = vpack.c.b16 %v663, %v662
          %v667 = vpack.c.b16 %v665, %v664
          %670 = vmatprep.subr.bf16.mxu0 0
          %671 = vmatpush1.bf16.msra.mxu0 0
          %672 = vmatprep.subr.bf16.mxu0 0
          %673 = vmatpush1.bf16.msra.mxu0 0
          %674 = vmatprep.subr.bf16.mxu0 0
          %675 = vmatpush1.bf16.msra.mxu0 0
          %676 = vmatprep.subr.bf16.mxu0 0
          %677 = vmatpush1.bf16.msra.mxu0 0
          %678 = vmatprep.subr.bf16.mxu0 0
          %679 = vmatpush1.bf16.msra.mxu0 0
          %680 = vmatprep.subr.bf16.mxu0 0
          %681 = vmatpush1.bf16.msra.mxu0 0
          %682 = vmatprep.subr.bf16.mxu0 0
          %683 = vmatpush1.bf16.msra.mxu0 %v667
          %684 = vmatprep.subr.bf16.mxu0 0
          %685 = vmatpush1.bf16.msra.mxu0 %v666
          %686 = vmatprep.subr.bf16.mxu0 0
          %687 = vmatpush2.bf16.msra.mxu0 0
          %688 = vmatprep.subr.bf16.mxu0 0
          %689 = vmatpush2.bf16.msra.mxu0 0
          %690 = vmatprep.subr.bf16.mxu0 0
          %691 = vmatpush2.bf16.msra.mxu0 0
          %692 = vmatprep.subr.bf16.mxu0 0
          %693 = vmatpush2.bf16.msra.mxu0 0
          %694 = vmatprep.subr.bf16.mxu0 0
          %695 = vmatpush2.bf16.msra.mxu0 0
          %696 = vmatprep.subr.bf16.mxu0 0
          %697 = vmatpush2.bf16.msra.mxu0 0
          %698 = vmatprep.subr.bf16.mxu0 0
          %699 = vmatpush2.bf16.msra.mxu0 0
          %700 = vmatprep.subr.bf16.mxu0 0
          %701 = vmatpush2.bf16.msra.mxu0 0
          %702 = vmatprep.mubr.bf16.mxu0 0
          %703 = vmatmul.mubr.bf16.gmra.mxu0 %v605
          %v704 = vpop.f32.mrf.mxu0
          %v705 = vadd.f32 %v656, %v704
          %v706 = vpop.f32.mrf.mxu0
          %v707 = vpop.f32.mrf.mxu0
          %v708 = vpop.f32.mrf.mxu0
          %709 = vdwg.mxu0
          %v710 = vpack.c.bf16 %v642, %v642
          %vm711 = vcmask 257024
          %712 = vst.msk [vmem:[#allocation2] sm:$0xf] %vm711, %v710
          %v713 = vpack.c.bf16 %v705, %v705
          %714 = vst.msk [vmem:[#allocation3] sm:$0xf] %vm711, %v713
        $region96: #{tpu_custom_call.1} parent=87 // pred_fallthru
          _
        %s715 = smul.u32 %s37, 8
        %s716 = scalar_lea.vmem %s572, %s715
        %v717 = vld [vmem:[%s716] sm:$0xff]
        %v718 = vpack.c.bf16 %v717, %v717
        %v719 = vld [vmem:[%s1] sm:$0xf]
        %v720 = vld [vmem:[%s1 + $0x4] sm:$0xf]
        %v721 = vld [vmem:[%s1 + $0x8] sm:$0xf]
        %v722 = vld [vmem:[%s1 + $0xc] sm:$0xf]
        %v723 = vld [vmem:[%s2] sm:$0x1]
        %v725 = vlaneseq
        %v726 = vshrl.u32 %v725, 7
        %v727 = vsub.s32 0, %v726
        %v728 = vrot.slane %v723, %v727
        %v734 = vunpack.c.l.b16 %v719
        %v735 = vunpack.c.l.b16 %v720
        %v736 = vunpack.c.l.b16 %v721
        %v737 = vunpack.c.l.b16 %v722
        %v738 = vpack.c.b16 %v735, %v734
        %v739 = vpack.c.b16 %v737, %v736
        %vm742 = vcmask 261120
        %v744 = vsel %vm742, %v718, 0
        %746 = vmatprep.subr.bf16.mxu0 0
        %747 = vmatpush1.bf16.msra.mxu0 0
        %748 = vmatprep.subr.bf16.mxu0 0
        %749 = vmatpush1.bf16.msra.mxu0 0
        %750 = vmatprep.subr.bf16.mxu0 0
        %751 = vmatpush1.bf16.msra.mxu0 0
        %752 = vmatprep.subr.bf16.mxu0 0
        %753 = vmatpush1.bf16.msra.mxu0 0
        %754 = vmatprep.subr.bf16.mxu0 0
        %755 = vmatpush1.bf16.msra.mxu0 0
        %756 = vmatprep.subr.bf16.mxu0 0
        %757 = vmatpush1.bf16.msra.mxu0 0
        %758 = vmatprep.subr.bf16.mxu0 0
        %759 = vmatpush1.bf16.msra.mxu0 %v739
        %760 = vmatprep.subr.bf16.mxu0 0
        %761 = vmatpush1.bf16.msra.mxu0 %v738
        %762 = vmatprep.subr.bf16.mxu0 0
        %763 = vmatpush2.bf16.msra.mxu0 0
        %764 = vmatprep.subr.bf16.mxu0 0
        %765 = vmatpush2.bf16.msra.mxu0 0
        %766 = vmatprep.subr.bf16.mxu0 0
        %767 = vmatpush2.bf16.msra.mxu0 0
        %768 = vmatprep.subr.bf16.mxu0 0
        %769 = vmatpush2.bf16.msra.mxu0 0
        %770 = vmatprep.subr.bf16.mxu0 0
        %771 = vmatpush2.bf16.msra.mxu0 0
        %772 = vmatprep.subr.bf16.mxu0 0
        %773 = vmatpush2.bf16.msra.mxu0 0
        %774 = vmatprep.subr.bf16.mxu0 0
        %775 = vmatpush2.bf16.msra.mxu0 0
        %776 = vmatprep.subr.bf16.mxu0 0
        %777 = vmatpush2.bf16.msra.mxu0 0
        %778 = vmatprep.mubr.bf16.mxu0 0
        %779 = vmatmul.mubr.bf16.gmra.mxu0 %v744
        %v780 = vpop.f32.mrf.mxu0
        %v781 = vadd.f32 %v728, %v780
        %v782 = vpop.f32.mrf.mxu0
        %v783 = vpop.f32.mrf.mxu0
        %v784 = vpop.f32.mrf.mxu0
        %785 = vdwg.mxu0
        %v786 = vpack.c.bf16 %v781, %v781
        %vm787 = vcmask 257024
        %788 = vst.msk [vmem:[#allocation4] sm:$0xf] %vm787, %v786
        %v789 = vld [vmem:[#allocation4] sm:$0xf]
        %v790 = vld [vmem:[#allocation2] sm:$0xf]
        %v791 = vld [vmem:[#allocation3] sm:$0xf]
        %vm792 = vcmask 64512
        %v794 = vsel %vm792, %v789, 0
        %v797 = vsel %vm792, %v790, 0
        %799 = vmatprep.subr.bf16.mxu0 0
        %800 = vmatpush1.bf16.xpose.msra.mxu0 0
        %801 = vmatprep.subr.bf16.mxu0 0
        %802 = vmatpush1.bf16.xpose.msra.mxu0 0
        %803 = vmatprep.subr.bf16.mxu0 0
        %804 = vmatpush1.bf16.xpose.msra.mxu0 0
        %805 = vmatprep.subr.bf16.mxu0 0
        %806 = vmatpush1.bf16.xpose.msra.mxu0 0
        %807 = vmatprep.subr.bf16.mxu0 0
        %808 = vmatpush1.bf16.xpose.msra.mxu0 0
        %809 = vmatprep.subr.bf16.mxu0 0
        %810 = vmatpush1.bf16.xpose.msra.mxu0 0
        %811 = vmatprep.subr.bf16.mxu0 0
        %812 = vmatpush1.bf16.xpose.msra.mxu0 0
        %813 = vmatprep.subr.bf16.mxu0 0
        %814 = vmatpush1.bf16.xpose.msra.mxu0 %v797
        %815 = vmatprep.subr.bf16.mxu0 0
        %816 = vmatpush2.bf16.xpose.msra.mxu0 0
        %817 = vmatprep.subr.bf16.mxu0 0
        %818 = vmatpush2.bf16.xpose.msra.mxu0 0
        %819 = vmatprep.subr.bf16.mxu0 0
        %820 = vmatpush2.bf16.xpose.msra.mxu0 0
        %821 = vmatprep.subr.bf16.mxu0 0
        %822 = vmatpush2.bf16.xpose.msra.mxu0 0
        %823 = vmatprep.subr.bf16.mxu0 0
        %824 = vmatpush2.bf16.xpose.msra.mxu0 0
        %825 = vmatprep.subr.bf16.mxu0 0
        %826 = vmatpush2.bf16.xpose.msra.mxu0 0
        %827 = vmatprep.subr.bf16.mxu0 0
        %828 = vmatpush2.bf16.xpose.msra.mxu0 0
        %829 = vmatprep.subr.bf16.mxu0 0
        %830 = vmatpush2.bf16.xpose.msra.mxu0 0
        %831 = vmatprep.mubr.bf16.mxu0 0
        %832 = vmatmul.mubr.bf16.gmra.mxu0 %v794
        %v833 = vpop.f32.mrf.mxu0
        %v834 = vadd.f32 0.0, %v833
        %v835 = vpop.f32.mrf.mxu0
        %v836 = vpop.f32.mrf.mxu0
        %v837 = vpop.f32.mrf.mxu0
        %838 = vdwg.mxu0
        %v839 = vmul.f32 %v834, 0.35355338
        %v840 = vsel %vm792, %v839, -inf
        %841 = vmax.xlane.f32.xlu0 %v840
        %v842 = vpop.xlane.xlu0 %841
        %v843 = vsub.f32 %v839, %v842
        %v844 = vmul.f32 %v843, 1.442695
        %v845 = vpow.pop %v844
        %v846 = vsel %vm792, %v845, 0.0
        %847 = vadd.xlane.f32.xlu0 %v846
        %v848 = vpop.xlane.xlu0 %847
        %v849 = vrcp.pop %v848
        %v850 = vmul.f32 %v845, %v849
        %v851 = vpack.c.bf16 %v850, %v850
        %v853 = vsel %vm792, %v851, 0
        %vm855 = vcmask 1043456
        %v857 = vsel %vm855, %v791, 0
        %859 = vmatprep.subr.bf16.mxu0 0
        %860 = vmatpush1.bf16.msra.mxu0 0
        %861 = vmatprep.subr.bf16.mxu0 0
        %862 = vmatpush1.bf16.msra.mxu0 0
        %863 = vmatprep.subr.bf16.mxu0 0
        %864 = vmatpush1.bf16.msra.mxu0 0
        %865 = vmatprep.subr.bf16.mxu0 0
        %866 = vmatpush1.bf16.msra.mxu0 0
        %867 = vmatprep.subr.bf16.mxu0 0
        %868 = vmatpush1.bf16.msra.mxu0 0
        %869 = vmatprep.subr.bf16.mxu0 0
        %870 = vmatpush1.bf16.msra.mxu0 0
        %871 = vmatprep.subr.bf16.mxu0 0
        %872 = vmatpush1.bf16.msra.mxu0 0
        %873 = vmatprep.subr.bf16.mxu0 0
        %874 = vmatpush1.bf16.msra.mxu0 %v857
        %875 = vmatprep.subr.bf16.mxu0 0
        %876 = vmatpush2.bf16.msra.mxu0 0
        %877 = vmatprep.subr.bf16.mxu0 0
        %878 = vmatpush2.bf16.msra.mxu0 0
        %879 = vmatprep.subr.bf16.mxu0 0
        %880 = vmatpush2.bf16.msra.mxu0 0
        %881 = vmatprep.subr.bf16.mxu0 0
        %882 = vmatpush2.bf16.msra.mxu0 0
        %883 = vmatprep.subr.bf16.mxu0 0
        %884 = vmatpush2.bf16.msra.mxu0 0
        %885 = vmatprep.subr.bf16.mxu0 0
        %886 = vmatpush2.bf16.msra.mxu0 0
        %887 = vmatprep.subr.bf16.mxu0 0
        %888 = vmatpush2.bf16.msra.mxu0 0
        %889 = vmatprep.subr.bf16.mxu0 0
        %890 = vmatpush2.bf16.msra.mxu0 0
        %891 = vmatprep.mubr.bf16.mxu0 0
        %892 = vmatmul.mubr.bf16.gmra.mxu0 %v853
        %v893 = vpop.f32.mrf.mxu0
        %v894 = vadd.f32 0.0, %v893
        %v895 = vpop.f32.mrf.mxu0
        %v896 = vpop.f32.mrf.mxu0
        %v897 = vpop.f32.mrf.mxu0
        %898 = vdwg.mxu0
        %v899 = vpack.c.bf16 %v894, %v894
        %vm900 = vcmask 60416
        %901 = vst.msk [vmem:[#allocation5] sm:$0xf] %vm900, %v899
        %v902 = vld [vmem:[#allocation4] sm:$0xf]
        %v903 = vld [vmem:[#allocation2] sm:$0xf]
        %v904 = vld [vmem:[#allocation3] sm:$0xf]
        %v906 = vunpack.c.l.b16 %v902
        %v907 = vpack.c.b16 %v906, %v906
        %908 = vrot.lane.b32.xlu0 %v907, 120
        %v909 = vpop.permute.xlu0 %908
        %v911 = vunpack.c.l.b16 %v903
        %v912 = vpack.c.b16 %v911, %v911
        %913 = vrot.lane.b32.xlu0 %v912, 120
        %v914 = vpop.permute.xlu0 %913
        %v916 = vsel %vm792, %v909, 0
        %v919 = vsel %vm792, %v914, 0
        %921 = vmatprep.subr.bf16.mxu0 0
        %922 = vmatpush1.bf16.xpose.msra.mxu0 0
        %923 = vmatprep.subr.bf16.mxu0 0
        %924 = vmatpush1.bf16.xpose.msra.mxu0 0
        %925 = vmatprep.subr.bf16.mxu0 0
        %926 = vmatpush1.bf16.xpose.msra.mxu0 0
        %927 = vmatprep.subr.bf16.mxu0 0
        %928 = vmatpush1.bf16.xpose.msra.mxu0 0
        %929 = vmatprep.subr.bf16.mxu0 0
        %930 = vmatpush1.bf16.xpose.msra.mxu0 0
        %931 = vmatprep.subr.bf16.mxu0 0
        %932 = vmatpush1.bf16.xpose.msra.mxu0 0
        %933 = vmatprep.subr.bf16.mxu0 0
        %934 = vmatpush1.bf16.xpose.msra.mxu0 0
        %935 = vmatprep.subr.bf16.mxu0 0
        %936 = vmatpush1.bf16.xpose.msra.mxu0 %v919
        %937 = vmatprep.subr.bf16.mxu0 0
        %938 = vmatpush2.bf16.xpose.msra.mxu0 0
        %939 = vmatprep.subr.bf16.mxu0 0
        %940 = vmatpush2.bf16.xpose.msra.mxu0 0
        %941 = vmatprep.subr.bf16.mxu0 0
        %942 = vmatpush2.bf16.xpose.msra.mxu0 0
        %943 = vmatprep.subr.bf16.mxu0 0
        %944 = vmatpush2.bf16.xpose.msra.mxu0 0
        %945 = vmatprep.subr.bf16.mxu0 0
        %946 = vmatpush2.bf16.xpose.msra.mxu0 0
        %947 = vmatprep.subr.bf16.mxu0 0
        %948 = vmatpush2.bf16.xpose.msra.mxu0 0
        %949 = vmatprep.subr.bf16.mxu0 0
        %950 = vmatpush2.bf16.xpose.msra.mxu0 0
        %951 = vmatprep.subr.bf16.mxu0 0
        %952 = vmatpush2.bf16.xpose.msra.mxu0 0
        %953 = vmatprep.mubr.bf16.mxu0 0
        %954 = vmatmul.mubr.bf16.gmra.mxu0 %v916
        %v955 = vpop.f32.mrf.mxu0
        %v956 = vadd.f32 0.0, %v955
        %v957 = vpop.f32.mrf.mxu0
        %v958 = vpop.f32.mrf.mxu0
        %v959 = vpop.f32.mrf.mxu0
        %960 = vdwg.mxu0
        %v961 = vmul.f32 %v956, 0.35355338
        %v962 = vsel %vm792, %v961, -inf
        %963 = vmax.xlane.f32.xlu0 %v962
        %v964 = vpop.xlane.xlu0 %963
        %v965 = vsub.f32 %v961, %v964
        %v966 = vmul.f32 %v965, 1.442695
        %v967 = vpow.pop %v966
        %v968 = vsel %vm792, %v967, 0.0
        %969 = vadd.xlane.f32.xlu0 %v968
        %v970 = vpop.xlane.xlu0 %969
        %v971 = vrcp.pop %v970
        %v972 = vmul.f32 %v967, %v971
        %v973 = vpack.c.bf16 %v972, %v972
        %v975 = vunpack.c.l.b16 %v904
        %v976 = vpack.c.b16 %v975, %v975
        %977 = vrot.lane.b32.xlu0 %v976, 120
        %v978 = vpop.permute.xlu0 %977
        %v980 = vsel %vm792, %v973, 0
        %v983 = vsel %vm855, %v978, 0
        %985 = vmatprep.subr.bf16.mxu0 0
        %986 = vmatpush1.bf16.msra.mxu0 0
        %987 = vmatprep.subr.bf16.mxu0 0
        %988 = vmatpush1.bf16.msra.mxu0 0
        %989 = vmatprep.subr.bf16.mxu0 0
        %990 = vmatpush1.bf16.msra.mxu0 0
        %991 = vmatprep.subr.bf16.mxu0 0
        %992 = vmatpush1.bf16.msra.mxu0 0
        %993 = vmatprep.subr.bf16.mxu0 0
        %994 = vmatpush1.bf16.msra.mxu0 0
        %995 = vmatprep.subr.bf16.mxu0 0
        %996 = vmatpush1.bf16.msra.mxu0 0
        %997 = vmatprep.subr.bf16.mxu0 0
        %998 = vmatpush1.bf16.msra.mxu0 0
        %999 = vmatprep.subr.bf16.mxu0 0
        %1000 = vmatpush1.bf16.msra.mxu0 %v983
        %1001 = vmatprep.subr.bf16.mxu0 0
        %1002 = vmatpush2.bf16.msra.mxu0 0
        %1003 = vmatprep.subr.bf16.mxu0 0
        %1004 = vmatpush2.bf16.msra.mxu0 0
        %1005 = vmatprep.subr.bf16.mxu0 0
        %1006 = vmatpush2.bf16.msra.mxu0 0
        %1007 = vmatprep.subr.bf16.mxu0 0
        %1008 = vmatpush2.bf16.msra.mxu0 0
        %1009 = vmatprep.subr.bf16.mxu0 0
        %1010 = vmatpush2.bf16.msra.mxu0 0
        %1011 = vmatprep.subr.bf16.mxu0 0
        %1012 = vmatpush2.bf16.msra.mxu0 0
        %1013 = vmatprep.subr.bf16.mxu0 0
        %1014 = vmatpush2.bf16.msra.mxu0 0
        %1015 = vmatprep.subr.bf16.mxu0 0
        %1016 = vmatpush2.bf16.msra.mxu0 0
        %1017 = vmatprep.mubr.bf16.mxu0 0
        %1018 = vmatmul.mubr.bf16.gmra.mxu0 %v980
        %v1019 = vpop.f32.mrf.mxu0
        %v1020 = vadd.f32 0.0, %v1019
        %v1021 = vpop.f32.mrf.mxu0
        %v1022 = vpop.f32.mrf.mxu0
        %v1023 = vpop.f32.mrf.mxu0
        %1024 = vdwg.mxu0
        %v1025 = vpack.c.bf16 %v1020, %v1020
        %v1027 = vunpack.c.l.b16 %v1025
        %v1028 = vpack.c.b16 %v1027, %v1027
        %1029 = vrot.lane.b32.xlu0 %v1028, 8
        %v1030 = vpop.permute.xlu0 %1029
        %vm1032 = vcmask 126016
        %1033 = vst.msk [vmem:[#allocation5] sm:$0xf] %vm1032, %v1030
        %v1034 = vld [vmem:[#allocation4] sm:$0xf]
        %v1035 = vld [vmem:[#allocation2] sm:$0xf]
        %v1036 = vld [vmem:[#allocation3] sm:$0xf]
        %v1038 = vunpack.c.l.b16 %v1034
        %v1039 = vpack.c.b16 %v1038, %v1038
        %1040 = vrot.lane.b32.xlu0 %v1039, 112
        %v1041 = vpop.permute.xlu0 %1040
        %v1043 = vunpack.c.l.b16 %v1035
        %v1044 = vpack.c.b16 %v1043, %v1043
        %1045 = vrot.lane.b32.xlu0 %v1044, 112
        %v1046 = vpop.permute.xlu0 %1045
        %v1048 = vsel %vm792, %v1041, 0
        %v1051 = vsel %vm792, %v1046, 0
        %1053 = vmatprep.subr.bf16.mxu0 0
        %1054 = vmatpush1.bf16.xpose.msra.mxu0 0
        %1055 = vmatprep.subr.bf16.mxu0 0
        %1056 = vmatpush1.bf16.xpose.msra.mxu0 0
        %1057 = vmatprep.subr.bf16.mxu0 0
        %1058 = vmatpush1.bf16.xpose.msra.mxu0 0
        %1059 = vmatprep.subr.bf16.mxu0 0
        %1060 = vmatpush1.bf16.xpose.msra.mxu0 0
        %1061 = vmatprep.subr.bf16.mxu0 0
        %1062 = vmatpush1.bf16.xpose.msra.mxu0 0
        %1063 = vmatprep.subr.bf16.mxu0 0
        %1064 = vmatpush1.bf16.xpose.msra.mxu0 0
        %1065 = vmatprep.subr.bf16.mxu0 0
        %1066 = vmatpush1.bf16.xpose.msra.mxu0 0
        %1067 = vmatprep.subr.bf16.mxu0 0
        %1068 = vmatpush1.bf16.xpose.msra.mxu0 %v1051
        %1069 = vmatprep.subr.bf16.mxu0 0
        %1070 = vmatpush2.bf16.xpose.msra.mxu0 0
        %1071 = vmatprep.subr.bf16.mxu0 0
        %1072 = vmatpush2.bf16.xpose.msra.mxu0 0
        %1073 = vmatprep.subr.bf16.mxu0 0
        %1074 = vmatpush2.bf16.xpose.msra.mxu0 0
        %1075 = vmatprep.subr.bf16.mxu0 0
        %1076 = vmatpush2.bf16.xpose.msra.mxu0 0
        %1077 = vmatprep.subr.bf16.mxu0 0
        %1078 = vmatpush2.bf16.xpose.msra.mxu0 0
        %1079 = vmatprep.subr.bf16.mxu0 0
        %1080 = vmatpush2.bf16.xpose.msra.mxu0 0
        %1081 = vmatprep.subr.bf16.mxu0 0
        %1082 = vmatpush2.bf16.xpose.msra.mxu0 0
        %1083 = vmatprep.subr.bf16.mxu0 0
        %1084 = vmatpush2.bf16.xpose.msra.mxu0 0
        %1085 = vmatprep.mubr.bf16.mxu0 0
        %1086 = vmatmul.mubr.bf16.gmra.mxu0 %v1048
        %v1087 = vpop.f32.mrf.mxu0
        %v1088 = vadd.f32 0.0, %v1087
        %v1089 = vpop.f32.mrf.mxu0
        %v1090 = vpop.f32.mrf.mxu0
        %v1091 = vpop.f32.mrf.mxu0
        %1092 = vdwg.mxu0
        %v1093 = vmul.f32 %v1088, 0.35355338
        %v1094 = vsel %vm792, %v1093, -inf
        %1095 = vmax.xlane.f32.xlu0 %v1094
        %v1096 = vpop.xlane.xlu0 %1095
        %v1097 = vsub.f32 %v1093, %v1096
        %v1098 = vmul.f32 %v1097, 1.442695
        %v1099 = vpow.pop %v1098
        %v1100 = vsel %vm792, %v1099, 0.0
        %1101 = vadd.xlane.f32.xlu0 %v1100
        %v1102 = vpop.xlane.xlu0 %1101
        %v1103 = vrcp.pop %v1102
        %v1104 = vmul.f32 %v1099, %v1103
        %v1105 = vpack.c.bf16 %v1104, %v1104
        %v1107 = vunpack.c.l.b16 %v1036
        %v1108 = vpack.c.b16 %v1107, %v1107
        %1109 = vrot.lane.b32.xlu0 %v1108, 112
        %v1110 = vpop.permute.xlu0 %1109
        %v1112 = vsel %vm792, %v1105, 0
        %v1115 = vsel %vm855, %v1110, 0
        %1117 = vmatprep.subr.bf16.mxu0 0
        %1118 = vmatpush1.bf16.msra.mxu0 0
        %1119 = vmatprep.subr.bf16.mxu0 0
        %1120 = vmatpush1.bf16.msra.mxu0 0
        %1121 = vmatprep.subr.bf16.mxu0 0
        %1122 = vmatpush1.bf16.msra.mxu0 0
        %1123 = vmatprep.subr.bf16.mxu0 0
        %1124 = vmatpush1.bf16.msra.mxu0 0
        %1125 = vmatprep.subr.bf16.mxu0 0
        %1126 = vmatpush1.bf16.msra.mxu0 0
        %1127 = vmatprep.subr.bf16.mxu0 0
        %1128 = vmatpush1.bf16.msra.mxu0 0
        %1129 = vmatprep.subr.bf16.mxu0 0
        %1130 = vmatpush1.bf16.msra.mxu0 0
        %1131 = vmatprep.subr.bf16.mxu0 0
        %1132 = vmatpush1.bf16.msra.mxu0 %v1115
        %1133 = vmatprep.subr.bf16.mxu0 0
        %1134 = vmatpush2.bf16.msra.mxu0 0
        %1135 = vmatprep.subr.bf16.mxu0 0
        %1136 = vmatpush2.bf16.msra.mxu0 0
        %1137 = vmatprep.subr.bf16.mxu0 0
        %1138 = vmatpush2.bf16.msra.mxu0 0
        %1139 = vmatprep.subr.bf16.mxu0 0
        %1140 = vmatpush2.bf16.msra.mxu0 0
        %1141 = vmatprep.subr.bf16.mxu0 0
        %1142 = vmatpush2.bf16.msra.mxu0 0
        %1143 = vmatprep.subr.bf16.mxu0 0
        %1144 = vmatpush2.bf16.msra.mxu0 0
        %1145 = vmatprep.subr.bf16.mxu0 0
        %1146 = vmatpush2.bf16.msra.mxu0 0
        %1147 = vmatprep.subr.bf16.mxu0 0
        %1148 = vmatpush2.bf16.msra.mxu0 0
        %1149 = vmatprep.mubr.bf16.mxu0 0
        %1150 = vmatmul.mubr.bf16.gmra.mxu0 %v1112
        %v1151 = vpop.f32.mrf.mxu0
        %v1152 = vadd.f32 0.0, %v1151
        %v1153 = vpop.f32.mrf.mxu0
        %v1154 = vpop.f32.mrf.mxu0
        %v1155 = vpop.f32.mrf.mxu0
        %1156 = vdwg.mxu0
        %v1157 = vpack.c.bf16 %v1152, %v1152
        %v1159 = vunpack.c.l.b16 %v1157
        %v1160 = vpack.c.b16 %v1159, %v1159
        %1161 = vrot.lane.b32.xlu0 %v1160, 16
        %v1162 = vpop.permute.xlu0 %1161
        %vm1164 = vcmask 191616
        %1165 = vst.msk [vmem:[#allocation5] sm:$0xf] %vm1164, %v1162
        %v1166 = vld [vmem:[#allocation4] sm:$0xf]
        %v1167 = vld [vmem:[#allocation2] sm:$0xf]
        %v1168 = vld [vmem:[#allocation3] sm:$0xf]
        %v1170 = vunpack.c.l.b16 %v1166
        %v1171 = vpack.c.b16 %v1170, %v1170
        %1172 = vrot.lane.b32.xlu0 %v1171, 104
        %v1173 = vpop.permute.xlu0 %1172
        %v1175 = vunpack.c.l.b16 %v1167
        %v1176 = vpack.c.b16 %v1175, %v1175
        %1177 = vrot.lane.b32.xlu0 %v1176, 104
        %v1178 = vpop.permute.xlu0 %1177
        %v1180 = vsel %vm792, %v1173, 0
        %v1183 = vsel %vm792, %v1178, 0
        %1185 = vmatprep.subr.bf16.mxu0 0
        %1186 = vmatpush1.bf16.xpose.msra.mxu0 0
        %1187 = vmatprep.subr.bf16.mxu0 0
        %1188 = vmatpush1.bf16.xpose.msra.mxu0 0
        %1189 = vmatprep.subr.bf16.mxu0 0
        %1190 = vmatpush1.bf16.xpose.msra.mxu0 0
        %1191 = vmatprep.subr.bf16.mxu0 0
        %1192 = vmatpush1.bf16.xpose.msra.mxu0 0
        %1193 = vmatprep.subr.bf16.mxu0 0
        %1194 = vmatpush1.bf16.xpose.msra.mxu0 0
        %1195 = vmatprep.subr.bf16.mxu0 0
        %1196 = vmatpush1.bf16.xpose.msra.mxu0 0
        %1197 = vmatprep.subr.bf16.mxu0 0
        %1198 = vmatpush1.bf16.xpose.msra.mxu0 0
        %1199 = vmatprep.subr.bf16.mxu0 0
        %1200 = vmatpush1.bf16.xpose.msra.mxu0 %v1183
        %1201 = vmatprep.subr.bf16.mxu0 0
        %1202 = vmatpush2.bf16.xpose.msra.mxu0 0
        %1203 = vmatprep.subr.bf16.mxu0 0
        %1204 = vmatpush2.bf16.xpose.msra.mxu0 0
        %1205 = vmatprep.subr.bf16.mxu0 0
        %1206 = vmatpush2.bf16.xpose.msra.mxu0 0
        %1207 = vmatprep.subr.bf16.mxu0 0
        %1208 = vmatpush2.bf16.xpose.msra.mxu0 0
        %1209 = vmatprep.subr.bf16.mxu0 0
        %1210 = vmatpush2.bf16.xpose.msra.mxu0 0
        %1211 = vmatprep.subr.bf16.mxu0 0
        %1212 = vmatpush2.bf16.xpose.msra.mxu0 0
        %1213 = vmatprep.subr.bf16.mxu0 0
        %1214 = vmatpush2.bf16.xpose.msra.mxu0 0
        %1215 = vmatprep.subr.bf16.mxu0 0
        %1216 = vmatpush2.bf16.xpose.msra.mxu0 0
        %1217 = vmatprep.mubr.bf16.mxu0 0
        %1218 = vmatmul.mubr.bf16.gmra.mxu0 %v1180
        %v1219 = vpop.f32.mrf.mxu0
        %v1220 = vadd.f32 0.0, %v1219
        %v1221 = vpop.f32.mrf.mxu0
        %v1222 = vpop.f32.mrf.mxu0
        %v1223 = vpop.f32.mrf.mxu0
        %1224 = vdwg.mxu0
        %v1225 = vmul.f32 %v1220, 0.35355338
        %v1226 = vsel %vm792, %v1225, -inf
        %1227 = vmax.xlane.f32.xlu0 %v1226
        %v1228 = vpop.xlane.xlu0 %1227
        %v1229 = vsub.f32 %v1225, %v1228
        %v1230 = vmul.f32 %v1229, 1.442695
        %v1231 = vpow.pop %v1230
        %v1232 = vsel %vm792, %v1231, 0.0
        %1233 = vadd.xlane.f32.xlu0 %v1232
        %v1234 = vpop.xlane.xlu0 %1233
        %v1235 = vrcp.pop %v1234
        %v1236 = vmul.f32 %v1231, %v1235
        %v1237 = vpack.c.bf16 %v1236, %v1236
        %v1239 = vunpack.c.l.b16 %v1168
        %v1240 = vpack.c.b16 %v1239, %v1239
        %1241 = vrot.lane.b32.xlu0 %v1240, 104
        %v1242 = vpop.permute.xlu0 %1241
        %v1244 = vsel %vm792, %v1237, 0
        %v1247 = vsel %vm855, %v1242, 0
        %1249 = vmatprep.subr.bf16.mxu0 0
        %1250 = vmatpush1.bf16.msra.mxu0 0
        %1251 = vmatprep.subr.bf16.mxu0 0
        %1252 = vmatpush1.bf16.msra.mxu0 0
        %1253 = vmatprep.subr.bf16.mxu0 0
        %1254 = vmatpush1.bf16.msra.mxu0 0
        %1255 = vmatprep.subr.bf16.mxu0 0
        %1256 = vmatpush1.bf16.msra.mxu0 0
        %1257 = vmatprep.subr.bf16.mxu0 0
        %1258 = vmatpush1.bf16.msra.mxu0 0
        %1259 = vmatprep.subr.bf16.mxu0 0
        %1260 = vmatpush1.bf16.msra.mxu0 0
        %1261 = vmatprep.subr.bf16.mxu0 0
        %1262 = vmatpush1.bf16.msra.mxu0 0
        %1263 = vmatprep.subr.bf16.mxu0 0
        %1264 = vmatpush1.bf16.msra.mxu0 %v1247
        %1265 = vmatprep.subr.bf16.mxu0 0
        %1266 = vmatpush2.bf16.msra.mxu0 0
        %1267 = vmatprep.subr.bf16.mxu0 0
        %1268 = vmatpush2.bf16.msra.mxu0 0
        %1269 = vmatprep.subr.bf16.mxu0 0
        %1270 = vmatpush2.bf16.msra.mxu0 0
        %1271 = vmatprep.subr.bf16.mxu0 0
        %1272 = vmatpush2.bf16.msra.mxu0 0
        %1273 = vmatprep.subr.bf16.mxu0 0
        %1274 = vmatpush2.bf16.msra.mxu0 0
        %1275 = vmatprep.subr.bf16.mxu0 0
        %1276 = vmatpush2.bf16.msra.mxu0 0
        %1277 = vmatprep.subr.bf16.mxu0 0
        %1278 = vmatpush2.bf16.msra.mxu0 0
        %1279 = vmatprep.subr.bf16.mxu0 0
        %1280 = vmatpush2.bf16.msra.mxu0 0
        %1281 = vmatprep.mubr.bf16.mxu0 0
        %1282 = vmatmul.mubr.bf16.gmra.mxu0 %v1244
        %v1283 = vpop.f32.mrf.mxu0
        %v1284 = vadd.f32 0.0, %v1283
        %v1285 = vpop.f32.mrf.mxu0
        %v1286 = vpop.f32.mrf.mxu0
        %v1287 = vpop.f32.mrf.mxu0
        %1288 = vdwg.mxu0
        %v1289 = vpack.c.bf16 %v1284, %v1284
        %v1291 = vunpack.c.l.b16 %v1289
        %v1292 = vpack.c.b16 %v1291, %v1291
        %1293 = vrot.lane.b32.xlu0 %v1292, 24
        %v1294 = vpop.permute.xlu0 %1293
        %vm1296 = vcmask 257216
        %1297 = vst.msk [vmem:[#allocation5] sm:$0xf] %vm1296, %v1294
        %v1298 = vld [vmem:[#allocation5] sm:$0xf]
        %v1299 = vld [vmem:[%s7] sm:$0xf]
        %v1300 = vld [vmem:[%s7 + $0x4] sm:$0xf]
        %v1301 = vld [vmem:[%s7 + $0x8] sm:$0xf]
        %v1302 = vld [vmem:[%s7 + $0xc] sm:$0xf]
        %v1303 = vld [vmem:[%s8] sm:$0x1]
        %v1305 = vlaneseq
        %v1306 = vshrl.u32 %v1305, 7
        %v1307 = vsub.s32 0, %v1306
        %v1308 = vrot.slane %v1303, %v1307
        %v1314 = vunpack.c.l.b16 %v1299
        %v1315 = vunpack.c.l.b16 %v1300
        %v1316 = vunpack.c.l.b16 %v1301
        %v1317 = vunpack.c.l.b16 %v1302
        %v1318 = vpack.c.b16 %v1315, %v1314
        %v1319 = vpack.c.b16 %v1317, %v1316
        %v1323 = vsel %vm742, %v1298, 0
        %1325 = vmatprep.subr.bf16.mxu0 0
        %1326 = vmatpush1.bf16.msra.mxu0 0
        %1327 = vmatprep.subr.bf16.mxu0 0
        %1328 = vmatpush1.bf16.msra.mxu0 0
        %1329 = vmatprep.subr.bf16.mxu0 0
        %1330 = vmatpush1.bf16.msra.mxu0 0
        %1331 = vmatprep.subr.bf16.mxu0 0
        %1332 = vmatpush1.bf16.msra.mxu0 0
        %1333 = vmatprep.subr.bf16.mxu0 0
        %1334 = vmatpush1.bf16.msra.mxu0 0
        %1335 = vmatprep.subr.bf16.mxu0 0
        %1336 = vmatpush1.bf16.msra.mxu0 0
        %1337 = vmatprep.subr.bf16.mxu0 0
        %1338 = vmatpush1.bf16.msra.mxu0 %v1319
        %1339 = vmatprep.subr.bf16.mxu0 0
        %1340 = vmatpush1.bf16.msra.mxu0 %v1318
        %1341 = vmatprep.subr.bf16.mxu0 0
        %1342 = vmatpush2.bf16.msra.mxu0 0
        %1343 = vmatprep.subr.bf16.mxu0 0
        %1344 = vmatpush2.bf16.msra.mxu0 0
        %1345 = vmatprep.subr.bf16.mxu0 0
        %1346 = vmatpush2.bf16.msra.mxu0 0
        %1347 = vmatprep.subr.bf16.mxu0 0
        %1348 = vmatpush2.bf16.msra.mxu0 0
        %1349 = vmatprep.subr.bf16.mxu0 0
        %1350 = vmatpush2.bf16.msra.mxu0 0
        %1351 = vmatprep.subr.bf16.mxu0 0
        %1352 = vmatpush2.bf16.msra.mxu0 0
        %1353 = vmatprep.subr.bf16.mxu0 0
        %1354 = vmatpush2.bf16.msra.mxu0 0
        %1355 = vmatprep.subr.bf16.mxu0 0
        %1356 = vmatpush2.bf16.msra.mxu0 0
        %1357 = vmatprep.mubr.bf16.mxu0 0
        %1358 = vmatmul.mubr.bf16.gmra.mxu0 %v1323
        %v1359 = vpop.f32.mrf.mxu0
        %v1360 = vadd.f32 %v1308, %v1359
        %v1361 = vpop.f32.mrf.mxu0
        %v1362 = vpop.f32.mrf.mxu0
        %v1363 = vpop.f32.mrf.mxu0
        %1364 = vdwg.mxu0
        %v1365 = vadd.f32 %v1360, %v717
        %v1366 = vld [vmem:[%s9] sm:$0x1]
        %v1367 = vld [vmem:[%s10] sm:$0x1]
        %v1368 = vsel %vm742, %v1365, 0.0
        %1369 = vadd.xlane.f32.xlu0 %v1368
        %v1370 = vpop.xlane.xlu0 %1369
        %v1371 = vrcp.pop 32.0
        %v1372 = vmul.f32 %v1370, %v1371
        %v1373 = vsub.f32 %v1365, %v1372
        %v1374 = vmul.f32 %v1373, %v1373
        %v1375 = vsel %vm742, %v1374, 0.0
        %1376 = vadd.xlane.f32.xlu0 %v1375
        %v1377 = vpop.xlane.xlu0 %1376
        %v1378 = vmul.f32 %v1377, %v1371
        %v1379 = vadd.f32 %v1378, 1e-05
        %v1380 = vrsqrt.pop %v1379
        %v1381 = vmul.f32 %v1373, %v1380
        %v1383 = vlaneseq
        %v1384 = vshrl.u32 %v1383, 7
        %v1385 = vsub.s32 0, %v1384
        %v1386 = vrot.slane %v1366, %v1385
        %v1388 = vmul.f32 %v1381, %v1386
        %v1390 = vlaneseq
        %v1391 = vshrl.u32 %v1390, 7
        %v1392 = vsub.s32 0, %v1391
        %v1393 = vrot.slane %v1367, %v1392
        %v1395 = vadd.f32 %v1388, %v1393
        %v1396 = vpack.c.bf16 %v1395, %v1395
        %v1397 = vld [vmem:[#allocation6] sm:$0xf]
        %v1398 = vld [vmem:[#allocation6 + $0x4] sm:$0xf]
        %v1399 = vld [vmem:[#allocation6 + $0x8] sm:$0xf]
        %v1400 = vld [vmem:[#allocation6 + $0xc] sm:$0xf]
        %v1401 = vld [vmem:[%s12] sm:$0x1]
        %v1403 = vlaneseq
        %v1404 = vshrl.u32 %v1403, 7
        %v1405 = vsub.s32 0, %v1404
        %v1406 = vrot.slane %v1401, %v1405
        %v1412 = vunpack.c.l.b16 %v1397
        %v1413 = vunpack.c.l.b16 %v1398
        %v1414 = vunpack.c.l.b16 %v1399
        %v1415 = vunpack.c.l.b16 %v1400
        %v1416 = vpack.c.b16 %v1413, %v1412
        %v1417 = vpack.c.b16 %v1415, %v1414
        %v1421 = vsel %vm742, %v1396, 0
        %1423 = vmatprep.subr.bf16.mxu0 0
        %1424 = vmatpush1.bf16.msra.mxu0 0
        %1425 = vmatprep.subr.bf16.mxu0 0
        %1426 = vmatpush1.bf16.msra.mxu0 0
        %1427 = vmatprep.subr.bf16.mxu0 0
        %1428 = vmatpush1.bf16.msra.mxu0 0
        %1429 = vmatprep.subr.bf16.mxu0 0
        %1430 = vmatpush1.bf16.msra.mxu0 0
        %1431 = vmatprep.subr.bf16.mxu0 0
        %1432 = vmatpush1.bf16.msra.mxu0 0
        %1433 = vmatprep.subr.bf16.mxu0 0
        %1434 = vmatpush1.bf16.msra.mxu0 0
        %1435 = vmatprep.subr.bf16.mxu0 0
        %1436 = vmatpush1.bf16.msra.mxu0 %v1417
        %1437 = vmatprep.subr.bf16.mxu0 0
        %1438 = vmatpush1.bf16.msra.mxu0 %v1416
        %1439 = vmatprep.subr.bf16.mxu0 0
        %1440 = vmatpush2.bf16.msra.mxu0 0
        %1441 = vmatprep.subr.bf16.mxu0 0
        %1442 = vmatpush2.bf16.msra.mxu0 0
        %1443 = vmatprep.subr.bf16.mxu0 0
        %1444 = vmatpush2.bf16.msra.mxu0 0
        %1445 = vmatprep.subr.bf16.mxu0 0
        %1446 = vmatpush2.bf16.msra.mxu0 0
        %1447 = vmatprep.subr.bf16.mxu0 0
        %1448 = vmatpush2.bf16.msra.mxu0 0
        %1449 = vmatprep.subr.bf16.mxu0 0
        %1450 = vmatpush2.bf16.msra.mxu0 0
        %1451 = vmatprep.subr.bf16.mxu0 0
        %1452 = vmatpush2.bf16.msra.mxu0 0
        %1453 = vmatprep.subr.bf16.mxu0 0
        %1454 = vmatpush2.bf16.msra.mxu0 0
        %1455 = vmatprep.mubr.bf16.mxu0 0
        %1456 = vmatmul.mubr.bf16.gmra.mxu0 %v1421
        %v1457 = vpop.f32.mrf.mxu0
        %v1458 = vadd.f32 %v1406, %v1457
        %v1459 = vpop.f32.mrf.mxu0
        %v1460 = vpop.f32.mrf.mxu0
        %v1461 = vpop.f32.mrf.mxu0
        %1462 = vdwg.mxu0
        %v1463 = vmax.f32 %v1458, 0.0
        %v1464 = vpack.c.bf16 %v1463, %v1463
        %v1465 = vld [vmem:[%s13] sm:$0xf]
        %v1466 = vld [vmem:[%s13 + $0x4] sm:$0xf]
        %v1467 = vld [vmem:[%s13 + $0x8] sm:$0xf]
        %v1468 = vld [vmem:[%s13 + $0xc] sm:$0xf]
        %v1469 = vld [vmem:[%s13 + $0x10] sm:$0xf]
        %v1470 = vld [vmem:[%s13 + $0x14] sm:$0xf]
        %v1471 = vld [vmem:[%s13 + $0x18] sm:$0xf]
        %v1472 = vld [vmem:[%s13 + $0x1c] sm:$0xf]
        %v1473 = vld [vmem:[%s13 + $0x20] sm:$0xf]
        %v1474 = vld [vmem:[%s13 + $0x24] sm:$0xf]
        %v1475 = vld [vmem:[%s13 + $0x28] sm:$0xf]
        %v1476 = vld [vmem:[%s13 + $0x2c] sm:$0xf]
        %v1477 = vld [vmem:[%s13 + $0x30] sm:$0xf]
        %v1478 = vld [vmem:[%s13 + $0x34] sm:$0xf]
        %v1479 = vld [vmem:[%s13 + $0x38] sm:$0xf]
        %v1480 = vld [vmem:[%s13 + $0x3c] sm:$0xf]
        %v1481 = vld [vmem:[%s14] sm:$0x1]
        %v1483 = vlaneseq
        %v1484 = vshrl.u32 %v1483, 7
        %v1485 = vsub.s32 0, %v1484
        %v1486 = vrot.slane %v1481, %v1485
        %v1504 = vunpack.c.l.b16 %v1465
        %v1505 = vunpack.c.l.b16 %v1466
        %v1506 = vunpack.c.l.b16 %v1467
        %v1507 = vunpack.c.l.b16 %v1468
        %v1508 = vunpack.c.l.b16 %v1469
        %v1509 = vunpack.c.l.b16 %v1470
        %v1510 = vunpack.c.l.b16 %v1471
        %v1511 = vunpack.c.l.b16 %v1472
        %v1512 = vunpack.c.l.b16 %v1473
        %v1513 = vunpack.c.l.b16 %v1474
        %v1514 = vunpack.c.l.b16 %v1475
        %v1515 = vunpack.c.l.b16 %v1476
        %v1516 = vunpack.c.l.b16 %v1477
        %v1517 = vunpack.c.l.b16 %v1478
        %v1518 = vunpack.c.l.b16 %v1479
        %v1519 = vunpack.c.l.b16 %v1480
        %v1520 = vpack.c.b16 %v1505, %v1504
        %v1521 = vpack.c.b16 %v1507, %v1506
        %v1522 = vpack.c.b16 %v1509, %v1508
        %v1523 = vpack.c.b16 %v1511, %v1510
        %v1524 = vpack.c.b16 %v1513, %v1512
        %v1525 = vpack.c.b16 %v1515, %v1514
        %v1526 = vpack.c.b16 %v1517, %v1516
        %v1527 = vpack.c.b16 %v1519, %v1518
        %1536 = vmatprep.subr.bf16.mxu0 0
        %1537 = vmatpush1.bf16.msra.mxu0 %v1527
        %1538 = vmatprep.subr.bf16.mxu0 0
        %1539 = vmatpush1.bf16.msra.mxu0 %v1526
        %1540 = vmatprep.subr.bf16.mxu0 0
        %1541 = vmatpush1.bf16.msra.mxu0 %v1525
        %1542 = vmatprep.subr.bf16.mxu0 0
        %1543 = vmatpush1.bf16.msra.mxu0 %v1524
        %1544 = vmatprep.subr.bf16.mxu0 0
        %1545 = vmatpush1.bf16.msra.mxu0 %v1523
        %1546 = vmatprep.subr.bf16.mxu0 0
        %1547 = vmatpush1.bf16.msra.mxu0 %v1522
        %1548 = vmatprep.subr.bf16.mxu0 0
        %1549 = vmatpush1.bf16.msra.mxu0 %v1521
        %1550 = vmatprep.subr.bf16.mxu0 0
        %1551 = vmatpush1.bf16.msra.mxu0 %v1520
        %1552 = vmatprep.subr.bf16.mxu0 0
        %1553 = vmatpush2.bf16.msra.mxu0 0
        %1554 = vmatprep.subr.bf16.mxu0 0
        %1555 = vmatpush2.bf16.msra.mxu0 0
        %1556 = vmatprep.subr.bf16.mxu0 0
        %1557 = vmatpush2.bf16.msra.mxu0 0
        %1558 = vmatprep.subr.bf16.mxu0 0
        %1559 = vmatpush2.bf16.msra.mxu0 0
        %1560 = vmatprep.subr.bf16.mxu0 0
        %1561 = vmatpush2.bf16.msra.mxu0 0
        %1562 = vmatprep.subr.bf16.mxu0 0
        %1563 = vmatpush2.bf16.msra.mxu0 0
        %1564 = vmatprep.subr.bf16.mxu0 0
        %1565 = vmatpush2.bf16.msra.mxu0 0
        %1566 = vmatprep.subr.bf16.mxu0 0
        %1567 = vmatpush2.bf16.msra.mxu0 0
        %1568 = vmatprep.mubr.bf16.mxu0 0
        %1569 = vmatmul.mubr.bf16.gmra.mxu0 %v1464
        %v1570 = vpop.f32.mrf.mxu0
        %v1571 = vadd.f32 %v1486, %v1570
        %v1572 = vpop.f32.mrf.mxu0
        %v1573 = vpop.f32.mrf.mxu0
        %v1574 = vpop.f32.mrf.mxu0
        %1575 = vdwg.mxu0
        %v1576 = vadd.f32 %v1571, %v1395
        %v1577 = vld [vmem:[%s15] sm:$0x1]
        %v1578 = vld [vmem:[%s16] sm:$0x1]
        %v1579 = vsel %vm742, %v1576, 0.0
        %1580 = vadd.xlane.f32.xlu0 %v1579
        %v1581 = vpop.xlane.xlu0 %1580
        %v1582 = vmul.f32 %v1581, %v1371
        %v1583 = vsub.f32 %v1576, %v1582
        %v1584 = vmul.f32 %v1583, %v1583
        %v1585 = vsel %vm742, %v1584, 0.0
        %1586 = vadd.xlane.f32.xlu0 %v1585
        %v1587 = vpop.xlane.xlu0 %1586
        %v1588 = vmul.f32 %v1587, %v1371
        %v1589 = vadd.f32 %v1588, 1e-05
        %v1590 = vrsqrt.pop %v1589
        %v1591 = vmul.f32 %v1583, %v1590
        %v1593 = vlaneseq
        %v1594 = vshrl.u32 %v1593, 7
        %v1595 = vsub.s32 0, %v1594
        %v1596 = vrot.slane %v1577, %v1595
        %v1598 = vmul.f32 %v1591, %v1596
        %v1600 = vlaneseq
        %v1601 = vshrl.u32 %v1600, 7
        %v1602 = vsub.s32 0, %v1601
        %v1603 = vrot.slane %v1578, %v1602
        %v1605 = vadd.f32 %v1598, %v1603
        %1606 = vst.msk [vmem:[%s568] sm:$0xff] %vm742, %v1605
        %s1607 = sand.u32 %s416, 1
        %s1608 = scalar_lea.sflag [#allocation8], %s1607
        %s1609 = sand.u32 %s416, 1
        %s1610 = smul.addr %s1609, 8
        %s1611 = scalar_lea.vmem [#allocation9], %s1610
        // Predicated region
        $region97: #{tpu_custom_call.1} parent=87 // pred_check
          %p1612 = pneg %p426
        $region98: #{tpu_custom_call.1} parent=87 // pred_check_branch
          %1614 = sbr.rel (%p1612) target = $region100
        $region99: #{tpu_custom_call.1} parent=87 // pred_region
          %s1616 = ssub.s32 128, 128
          %1617 = vsyncadd %s1608, %s1616
          %s1618 = sadd.s32 %s37, %s36
          %s1619 = smul.addr %s1618, 128
          %s1620 = scalar_lea.hbm %s17, %s1619
          %s1622 = sshll.u32 %s1611, 4
          %s1623 = int_to_ptr.vmem [resolvable:$true] %s1622
          %1625 = dma.vmem_to_hbm [thread:$0]  %s1623, 128, %s1620, %s1608
        $region100: #{tpu_custom_call.1} parent=87 // pred_fallthru
          _
      $region88: #{tpu_custom_call.1} parent=5 // pred_fallthru
        _
      %p1626 = scmp.le.s32.totalorder 2, %s27
      // Predicated region
      $region101: #{tpu_custom_call.1} parent=5 // pred_check
        %p1627 = pneg %p1626
      $region102: #{tpu_custom_call.1} parent=5 // pred_check_branch
        %1629 = sbr.rel (%p1627) target = $region104
      $region103: #{tpu_custom_call.1} parent=5 // pred_region
        %s1630 = ssub.s32 %s27, 2
        // Predicated region
        $region105: #{tpu_custom_call.1} parent=103 // pred_check
          %p1631 = pneg %p432
        $region106: #{tpu_custom_call.1} parent=103 // pred_check_branch
          %1633 = sbr.rel (%p1631) target = $region108
        $region107: #{tpu_custom_call.1} parent=103 // pred_region
          %s1634 = sand.u32 %s417, 1
          %s1635 = scalar_lea.sflag [#allocation8], %s1634
          %s1636 = sand.u32 %s417, 1
          %s1637 = smul.addr %s1636, 8
          %s1638 = scalar_lea.vmem [#allocation9], %s1637
          %1639 = dma.done %s1635, 128
        $region108: #{tpu_custom_call.1} parent=103 // pred_fallthru
          _
      $region104: #{tpu_custom_call.1} parent=5 // pred_fallthru
        _
    $region6: #{tpu_custom_call.1} parent=1 // loop_footer
      %s31 = sadd.s32 1, %s27
    $region7: #{tpu_custom_call.1} parent=1 // loop_footer_branch
      %26 = sbr.rel target = $region3
    $region8: #{tpu_custom_call.1} parent=1 // loop_exit
      _
    %1640 = vsyncpa [#allocation7], 1
    %s1641 = scalar_lea.sflag [#allocation7], 1
    %1642 = vsyncpa %s1641, 1
    %1643 = vsyncpa [#allocation8], 1
    %s1644 = scalar_lea.sflag [#allocation8], 1
    %1645 = vsyncpa %s1644, 1

</llo_original>
